<compile_context>
chip_gen: v7x
topology: tpu7x:2x2x1
jax: 0.10.0
libtpu: 0.0.40
codegen_flags: <defaults>
</compile_context>

<pallas_src>
import functools

import jax
import jax.numpy as jnp
from jax.experimental import pallas as pl
from jax.experimental.pallas import tpu as pltpu


def _deepgat_fused_kernel(x_ref, adj_ref, params_ref, slab_ref, *,
                          layer_cfg, layout, neg_slope=0.2):
    """Fused inconv -> midconv -> outconv DeepGAT forward, fully VMEM-resident."""
    # adj is an int8 {0,1} mask; cast to f32 before compare so the predicate is
    # produced in f32 lane layout (cheap, avoids packed-i8 mask relayouts).
    adj_mask = adj_ref[...].astype(jnp.float32) > 0.0   # (N, N); adj[i, j]: edge j -> i
    n = adj_mask.shape[0]

    def param(idx):
        r, h, w = layout[idx]
        return params_ref[r:r + h, 0:w]     # static slice of the param slab

    def gat(x, W, a_src_rows, a_dst_cols, heads, out_ch, concat, apply_elu,
            want_alpha):
        # One MXU matmul for all heads:  feat = x @ W  -> (N, heads*out_ch).
        # TODO(synk): at large N on v6e/v7x cast the matmul operands to bf16
        # (keep preferred_element_type=f32 and the softmax chain in f32).
        feat = jnp.dot(x, W, preferred_element_type=jnp.float32)
        # e_dst[n, h] = a_dst[h] . feat_head_h[n]   -> (N, heads)
        e_dst = jnp.dot(feat, a_dst_cols, preferred_element_type=jnp.float32)
        # e_src[h, n] = a_src[h] . feat_head_h[n]   -> (heads, N), already
        # lane-oriented along the source-node axis (no transposes needed).
        e_src = jax.lax.dot_general(
            a_src_rows, feat, (((1,), (1,)), ((), ())),
            preferred_element_type=jnp.float32)

        outs, acc, alphas = [], None, []
        for h in range(heads):                      # static, heads <= 2
            logits = e_dst[:, h:h + 1] + e_src[h:h + 1, :]        # (N, N)
            logits = jnp.where(logits >= 0.0, logits, neg_slope * logits)
            # Masked softmax over in-neighbors j (axis=1).  Every row has a
            # self-loop so m is finite and exp(-1e30 - m) underflows to exactly
            # 0 -> no post-exp re-mask needed.
            masked = jnp.where(adj_mask, logits, -1e30)
            m = jnp.max(masked, axis=1, keepdims=True)
            p = jnp.exp(masked - m)
            denom = jnp.sum(p, axis=1, keepdims=True)
            denom = jnp.maximum(denom, 1e-30)       # guard if self-loops absent
            alpha = p * pl.reciprocal(denom, approx=False)         # (N, N)
            if want_alpha:
                alphas.append(alpha)
            # Aggregate messages for this head (MXU matmul).
            out_h = jnp.dot(alpha, feat[:, h * out_ch:(h + 1) * out_ch],
                            preferred_element_type=jnp.float32)    # (N, C)
            if concat:
                outs.append(out_h)
            else:
                acc = out_h if acc is None else acc + out_h

        out = jnp.concatenate(outs, axis=1) if concat else acc * (1.0 / heads)
        if apply_elu:
            out = jnp.where(out > 0.0, out, jnp.exp(out) - 1.0)
        return out, feat, alphas

    cfg1, cfg2, cfg3 = layer_cfg
    # dropout(p=0, eval) and in/mid/out norms (Identity) are no-ops.
    x0 = x_ref[...]
    x1, h1, _ = gat(x0, param(0), param(1), param(2), *cfg1, False)
    x2, h2, _ = gat(x1, param(3), param(4), param(5), *cfg2, False)
    x3, h3, alphas = gat(x2, param(6), param(7), param(8), *cfg3, True)

    # Pack logits + hs + outconv alpha into one lane-dense slab -> single
    # unmasked store (no separate masked (1, N, N) alpha output).
    payload = jnp.concatenate([x3, h1, h2, h3] + alphas, axis=1)
    pad = slab_ref.shape[1] - payload.shape[1]
    slab_ref[...] = jnp.concatenate(
        [payload, jnp.zeros((n, pad), jnp.float32)], axis=1)


def _attn_block_rows(a):
    """(heads, C) -> (heads, heads*C); row h holds a[h] in lane block h."""
    heads, c = a.shape
    m = jnp.zeros((heads, heads * c), jnp.float32)
    for h in range(heads):
        m = m.at[h, h * c:(h + 1) * c].set(a[h])
    return m


def _pack_params(arrays, width=128):
    """Pack small 2-D f32 params into one (rows, width) slab + static layout."""
    layout, bands, r = [], [], 0
    for a in arrays:
        a = jnp.asarray(a, jnp.float32)
        h, w = a.shape
        layout.append((r, h, w))
        bands.append(jnp.pad(a, ((0, 0), (0, width - w))))
        r += h
    slab = jnp.concatenate(bands, axis=0)
    padded = ((r + 7) // 8) * 8
    if padded != r:
        slab = jnp.pad(slab, ((0, padded - r), (0, 0)))
    return slab, tuple(layout)


def deepgat_forward(x, adj, params, *, n_hid=8, n_hid_mid=4, n_class=4,
                    n_head=2, n_head_last=1):
    """Transductive DeepGAT forward: (logits, hs, alpha_of_outconv)."""
    N = x.shape[0]
    layer_cfg = (
        (n_head, n_hid, True, True),           # inconv : concat + ELU
        (n_head, n_hid_mid, True, True),       # midconv: concat + ELU
        (n_head_last, n_class, False, False),  # outconv: mean, no ELU
    )
    # Block-structured attention matrices (tiny; built once at the JAX level)
    # and all weights packed into ONE (rows, 128) param slab -> one input DMA.
    param_arrays = [
        params['in_W'],  _attn_block_rows(params['in_as']),
        _attn_block_rows(params['in_ad']).T,
        params['mid_W'], _attn_block_rows(params['mid_as']),
        _attn_block_rows(params['mid_ad']).T,
        params['out_W'], _attn_block_rows(params['out_as']),
        _attn_block_rows(params['out_ad']).T,
    ]
    pslab, layout = _pack_params(param_arrays)

    widths = [n_class,                 # x3
              n_head * n_hid,          # inconv.h
              n_head * n_hid_mid,      # midconv.h
              n_head_last * n_class]   # outconv.h
    alpha_cols = n_head_last * N
    total = sum(widths) + alpha_cols          # = 64 for this config
    slab_w = max(128, ((total + 127) // 128) * 128)

    adj_i8 = (adj > 0).astype(jnp.int8)       # binary mask; 4x less DMA than f32

    kernel = functools.partial(_deepgat_fused_kernel,
                               layer_cfg=layer_cfg, layout=layout)
    vmem = pl.BlockSpec(memory_space=pltpu.MemorySpace.VMEM)
    slab = pl.pallas_call(
        kernel,
        out_shape=jax.ShapeDtypeStruct((N, slab_w), jnp.float32),
        in_specs=[vmem, vmem, vmem],
        out_specs=vmem,
    )(x, adj_i8, pslab)

    pieces, off = [], 0
    for w in widths:
        pieces.append(slab[:, off:off + w])
        off += w
    x3, h1, h2, h3 = pieces
    alpha = (slab[:, off:off + alpha_cols]
             .reshape(N, n_head_last, N).transpose(1, 0, 2))
    return x3, [h1, h2, h3], alpha


def deepgat_reference(x, adj, params, *, n_hid=8, n_hid_mid=4, n_class=4,
                      n_head=2, n_head_last=1, neg_slope=0.2):
    """Pure-JAX reference (same math, per-head formulation)."""
    mask = adj > 0.0

    def gat_ref(x, W, a_src, a_dst, heads, c, concat, elu):
        feat = x @ W
        outs, acc, alphas = [], None, []
        for h in range(heads):
            fh = feat[:, h * c:(h + 1) * c]
            es = fh @ a_src[h]
            ed = fh @ a_dst[h]
            logits = ed[:, None] + es[None, :]
            logits = jnp.where(logits >= 0.0, logits, neg_slope * logits)
            masked = jnp.where(mask, logits, -1e30)
            m = masked.max(axis=1, keepdims=True)
            p = jnp.where(mask, jnp.exp(masked - m), 0.0)
            al = p / p.sum(axis=1, keepdims=True)
            alphas.append(al)
            oh = al @ fh
            if concat:
                outs.append(oh)
            else:
                acc = oh if acc is None else acc + oh
        out = jnp.concatenate(outs, axis=1) if concat else acc / heads
        if elu:
            out = jnp.where(out > 0.0, out, jnp.exp(out) - 1.0)
        return out, feat, jnp.stack(alphas)

    x1, h1, _ = gat_ref(x, params['in_W'], params['in_as'], params['in_ad'],
                        n_head, n_hid, True, True)
    x2, h2, _ = gat_ref(x1, params['mid_W'], params['mid_as'], params['mid_ad'],
                        n_head, n_hid_mid, True, True)
    x3, h3, al = gat_ref(x2, params['out_W'], params['out_as'], params['out_ad'],
                         n_head_last, n_class, False, False)
    return x3, [h1, h2, h3], al


def init_params(key, n_feat, n_hid, n_class, n_head, n_head_last):
    """Deterministic synthetic parameters (glorot-ish normal)."""
    ks = jax.random.split(key, 9)

    def lin(k, fan_in, fan_out):
        return (jax.random.normal(k, (fan_in, fan_out), jnp.float32)
                / jnp.sqrt(jnp.float32(fan_in)))

    n_hid_mid = 4  # dim_reduction_per_l(1) for this config
    params = {
        'in_W': lin(ks[0], n_feat, n_head * n_hid),
        'in_as': jax.random.normal(ks[1], (n_head, n_hid), jnp.float32) * 0.1,
        'in_ad': jax.random.normal(ks[2], (n_head, n_hid), jnp.float32) * 0.1,
        'mid_W': lin(ks[3], n_head * n_hid, n_head * n_hid_mid),
        'mid_as': jax.random.normal(ks[4], (n_head, n_hid_mid), jnp.float32) * 0.1,
        'mid_ad': jax.random.normal(ks[5], (n_head, n_hid_mid), jnp.float32) * 0.1,
        'out_W': lin(ks[6], n_head * n_hid_mid, n_head_last * n_class),
        'out_as': jax.random.normal(ks[7], (n_head_last, n_class), jnp.float32) * 0.1,
        'out_ad': jax.random.normal(ks[8], (n_head_last, n_class), jnp.float32) * 0.1,
    }
    return params, n_hid_mid


if __name__ == "__main__":
    N = 32
    n_feat = 16
    n_hid = 8
    n_class = 4
    n_head = 2
    n_head_last = 1
    n_edges = 96

    key = jax.random.PRNGKey(0)
    kx, ke1, ke2, kp = jax.random.split(key, 4)

    x = jax.random.normal(kx, (N, n_feat), jnp.float32)

    # Random directed edge_index -> dense adjacency (adj[dst, src] = 1), plus
    # self-loops (remove_self_loops + add_self_loops for dense adj).  adj is
    # used purely as a binary mask.
    src = jax.random.randint(ke1, (n_edges,), 0, N)
    dst = jax.random.randint(ke2, (n_edges,), 0, N)
    adj = jnp.zeros((N, N), jnp.float32).at[dst, src].set(1.0)
    adj = adj * (1.0 - jnp.eye(N, dtype=jnp.float32))
    adj = jnp.maximum(adj, jnp.eye(N, dtype=jnp.float32))

    params, n_hid_mid = init_params(kp, n_feat, n_hid, n_class, n_head,
                                    n_head_last)

    fwd = jax.jit(functools.partial(deepgat_forward, n_hid=n_hid,
                                    n_hid_mid=n_hid_mid, n_class=n_class,
                                    n_head=n_head, n_head_last=n_head_last))
    out, hs, alpha = fwd(x, adj, params)
    jax.block_until_ready((out, hs, alpha))

    assert out.shape == (N, n_class)
    assert hs[0].shape == (N, n_head * n_hid)
    assert hs[1].shape == (N, n_head * n_hid_mid)
    assert hs[2].shape == (N, n_head_last * n_class)
    assert alpha.shape == (n_head_last, N, N)
    # softmax rows of the attention must sum to 1 (exact-reciprocal softmax)
    assert jnp.allclose(alpha[0].sum(axis=1), 1.0, atol=1e-4)

    # Compare against pure-JAX reference.
    r_out, r_hs, r_alpha = deepgat_reference(
        x, adj, params, n_hid=n_hid, n_hid_mid=n_hid_mid, n_class=n_class,
        n_head=n_head, n_head_last=n_head_last)

    def close(a, b, tol=5e-3):
        return bool(jnp.max(jnp.abs(a - b)) <= tol)

    assert close(out, r_out)
    assert close(hs[0], r_hs[0]) and close(hs[1], r_hs[1]) and close(hs[2], r_hs[2])
    assert close(alpha, r_alpha)
    assert bool(jnp.all(jnp.isfinite(out)))

    print("KERNEL_OK")
</pallas_src>

<mosaic_0001>
module attributes {stable_mosaic.version = 11 : i64} {
  func.func @_deepgat_fused_kernel(%arg0: memref<32x16xf32, #tpu.memory_space<vmem>>, %arg1: memref<32x32xi8, #tpu.memory_space<vmem>>, %arg2: memref<80x128xf32, #tpu.memory_space<vmem>>, %arg3: memref<32x128xf32, #tpu.memory_space<vmem>>) attributes {dimension_semantics = [], scalar_prefetch = 0 : i64, scratch_operands = 0 : i64, tpu.core_type = #tpu.core_type<tc>} {
    %c0 = arith.constant 0 : index
    %c0_0 = arith.constant 0 : index
    %0 = vector.load %arg1[%c0, %c0_0] : memref<32x32xi8, #tpu.memory_space<vmem>>, vector<32x32xi8>
    %1 = arith.sitofp %0 : vector<32x32xi8> to vector<32x32xf32>
    %cst = arith.constant 0.000000e+00 : f32
    %2 = vector.broadcast %cst : f32 to vector<32x32xf32>
    %3 = arith.cmpf ogt, %1, %2 : vector<32x32xf32>
    %c0_1 = arith.constant 0 : index
    %c0_2 = arith.constant 0 : index
    %4 = vector.load %arg0[%c0_1, %c0_2] : memref<32x16xf32, #tpu.memory_space<vmem>>, vector<32x16xf32>
    %c0_3 = arith.constant 0 : index
    %c0_4 = arith.constant 0 : index
    %5 = vector.load %arg2[%c0_3, %c0_4] : memref<80x128xf32, #tpu.memory_space<vmem>>, vector<16x16xf32>
    %c16 = arith.constant 16 : index
    %c0_5 = arith.constant 0 : index
    %6 = vector.load %arg2[%c16, %c0_5] : memref<80x128xf32, #tpu.memory_space<vmem>>, vector<2x16xf32>
    %c18 = arith.constant 18 : index
    %c0_6 = arith.constant 0 : index
    %7 = vector.load %arg2[%c18, %c0_6] : memref<80x128xf32, #tpu.memory_space<vmem>>, vector<16x2xf32>
    %cst_7 = arith.constant dense<0.000000e+00> : vector<32x16xf32>
    %8 = tpu.matmul %4, %5, %cst_7 {dimension_numbers = #tpu.dot_dimension_numbers<[1], [0], [0], [1], [0, 0, 1, 1], [], []>} : vector<32x16xf32>, vector<16x16xf32>, vector<32x16xf32> -> vector<32x16xf32>
    %cst_8 = arith.constant dense<0.000000e+00> : vector<32x2xf32>
    %9 = tpu.matmul %8, %7, %cst_8 {dimension_numbers = #tpu.dot_dimension_numbers<[1], [0], [0], [1], [0, 0, 1, 1], [], []>} : vector<32x16xf32>, vector<16x2xf32>, vector<32x2xf32> -> vector<32x2xf32>
    %cst_9 = arith.constant dense<0.000000e+00> : vector<2x32xf32>
    %10 = tpu.matmul %6, %8, %cst_9 {dimension_numbers = #tpu.dot_dimension_numbers<[1], [1], [0], [0], [0, 0, 1, 0], [], []>} : vector<2x16xf32>, vector<32x16xf32>, vector<2x32xf32> -> vector<2x32xf32>
    %11 = vector.extract_strided_slice %9 {offsets = [0, 0], sizes = [32, 1], strides = [1, 1]} : vector<32x2xf32> to vector<32x1xf32>
    %12 = vector.extract_strided_slice %10 {offsets = [0, 0], sizes = [1, 32], strides = [1, 1]} : vector<2x32xf32> to vector<1x32xf32>
    %13 = vector.broadcast %11 : vector<32x1xf32> to vector<32x32xf32>
    %14 = vector.broadcast %12 : vector<1x32xf32> to vector<32x32xf32>
    %15 = arith.addf %13, %14 : vector<32x32xf32>
    %cst_10 = arith.constant 0.000000e+00 : f32
    %16 = vector.broadcast %cst_10 : f32 to vector<32x32xf32>
    %17 = arith.cmpf oge, %15, %16 : vector<32x32xf32>
    %cst_11 = arith.constant 2.000000e-01 : f32
    %18 = vector.broadcast %cst_11 : f32 to vector<32x32xf32>
    %19 = arith.mulf %18, %15 : vector<32x32xf32>
    %20 = arith.select %17, %15, %19 : vector<32x32xi1>, vector<32x32xf32>
    %cst_12 = arith.constant -1.000000e+30 : f32
    %21 = vector.broadcast %cst_12 : f32 to vector<32x32xf32>
    %22 = arith.select %3, %20, %21 : vector<32x32xi1>, vector<32x32xf32>
    %cst_13 = arith.constant dense<0xFF800000> : vector<32xf32>
    %23 = vector.multi_reduction <maximumf>, %22, %cst_13 [1] : vector<32x32xf32> to vector<32xf32>
    %24 = vector.shape_cast %23 : vector<32xf32> to vector<32x1xf32>
    %25 = vector.broadcast %24 : vector<32x1xf32> to vector<32x32xf32>
    %26 = arith.subf %22, %25 : vector<32x32xf32>
    %27 = math.exp %26 : vector<32x32xf32>
    %cst_14 = arith.constant dense<0.000000e+00> : vector<32xf32>
    %28 = vector.multi_reduction <add>, %27, %cst_14 [1] : vector<32x32xf32> to vector<32xf32>
    %29 = vector.shape_cast %28 : vector<32xf32> to vector<32x1xf32>
    %cst_15 = arith.constant 1.000000e-30 : f32
    %30 = vector.broadcast %cst_15 : f32 to vector<32x1xf32>
    %31 = arith.maximumf %29, %30 : vector<32x1xf32>
    %32 = tpu.reciprocal %31 : vector<32x1xf32> -> vector<32x1xf32>
    %33 = vector.broadcast %32 : vector<32x1xf32> to vector<32x32xf32>
    %34 = arith.mulf %27, %33 : vector<32x32xf32>
    %35 = vector.extract_strided_slice %8 {offsets = [0, 0], sizes = [32, 8], strides = [1, 1]} : vector<32x16xf32> to vector<32x8xf32>
    %cst_16 = arith.constant dense<0.000000e+00> : vector<32x8xf32>
    %36 = tpu.matmul %34, %35, %cst_16 {dimension_numbers = #tpu.dot_dimension_numbers<[1], [0], [0], [1], [0, 0, 1, 1], [], []>} : vector<32x32xf32>, vector<32x8xf32>, vector<32x8xf32> -> vector<32x8xf32>
    %37 = vector.extract_strided_slice %9 {offsets = [0, 1], sizes = [32, 1], strides = [1, 1]} : vector<32x2xf32> to vector<32x1xf32>
    %38 = vector.extract_strided_slice %10 {offsets = [1, 0], sizes = [1, 32], strides = [1, 1]} : vector<2x32xf32> to vector<1x32xf32>
    %39 = vector.broadcast %37 : vector<32x1xf32> to vector<32x32xf32>
    %40 = vector.broadcast %38 : vector<1x32xf32> to vector<32x32xf32>
    %41 = arith.addf %39, %40 : vector<32x32xf32>
    %cst_17 = arith.constant 0.000000e+00 : f32
    %42 = vector.broadcast %cst_17 : f32 to vector<32x32xf32>
    %43 = arith.cmpf oge, %41, %42 : vector<32x32xf32>
    %cst_18 = arith.constant 2.000000e-01 : f32
    %44 = vector.broadcast %cst_18 : f32 to vector<32x32xf32>
    %45 = arith.mulf %44, %41 : vector<32x32xf32>
    %46 = arith.select %43, %41, %45 : vector<32x32xi1>, vector<32x32xf32>
    %cst_19 = arith.constant -1.000000e+30 : f32
    %47 = vector.broadcast %cst_19 : f32 to vector<32x32xf32>
    %48 = arith.select %3, %46, %47 : vector<32x32xi1>, vector<32x32xf32>
    %cst_20 = arith.constant dense<0xFF800000> : vector<32xf32>
    %49 = vector.multi_reduction <maximumf>, %48, %cst_20 [1] : vector<32x32xf32> to vector<32xf32>
    %50 = vector.shape_cast %49 : vector<32xf32> to vector<32x1xf32>
    %51 = vector.broadcast %50 : vector<32x1xf32> to vector<32x32xf32>
    %52 = arith.subf %48, %51 : vector<32x32xf32>
    %53 = math.exp %52 : vector<32x32xf32>
    %cst_21 = arith.constant dense<0.000000e+00> : vector<32xf32>
    %54 = vector.multi_reduction <add>, %53, %cst_21 [1] : vector<32x32xf32> to vector<32xf32>
    %55 = vector.shape_cast %54 : vector<32xf32> to vector<32x1xf32>
    %cst_22 = arith.constant 1.000000e-30 : f32
    %56 = vector.broadcast %cst_22 : f32 to vector<32x1xf32>
    %57 = arith.maximumf %55, %56 : vector<32x1xf32>
    %58 = tpu.reciprocal %57 : vector<32x1xf32> -> vector<32x1xf32>
    %59 = vector.broadcast %58 : vector<32x1xf32> to vector<32x32xf32>
    %60 = arith.mulf %53, %59 : vector<32x32xf32>
    %61 = vector.extract_strided_slice %8 {offsets = [0, 8], sizes = [32, 8], strides = [1, 1]} : vector<32x16xf32> to vector<32x8xf32>
    %cst_23 = arith.constant dense<0.000000e+00> : vector<32x8xf32>
    %62 = tpu.matmul %60, %61, %cst_23 {dimension_numbers = #tpu.dot_dimension_numbers<[1], [0], [0], [1], [0, 0, 1, 1], [], []>} : vector<32x32xf32>, vector<32x8xf32>, vector<32x8xf32> -> vector<32x8xf32>
    %63 = tpu.concatenate %36, %62 in 1 : vector<32x8xf32>, vector<32x8xf32> -> vector<32x16xf32>
    %cst_24 = arith.constant 0.000000e+00 : f32
    %64 = vector.broadcast %cst_24 : f32 to vector<32x16xf32>
    %65 = arith.cmpf ogt, %63, %64 : vector<32x16xf32>
    %66 = math.exp %63 : vector<32x16xf32>
    %cst_25 = arith.constant 1.000000e+00 : f32
    %67 = vector.broadcast %cst_25 : f32 to vector<32x16xf32>
    %68 = arith.subf %66, %67 : vector<32x16xf32>
    %69 = arith.select %65, %63, %68 : vector<32x16xi1>, vector<32x16xf32>
    %c34 = arith.constant 34 : index
    %c0_26 = arith.constant 0 : index
    %70 = vector.load %arg2[%c34, %c0_26] : memref<80x128xf32, #tpu.memory_space<vmem>>, vector<16x8xf32>
    %c50 = arith.constant 50 : index
    %c0_27 = arith.constant 0 : index
    %71 = vector.load %arg2[%c50, %c0_27] : memref<80x128xf32, #tpu.memory_space<vmem>>, vector<2x8xf32>
    %c52 = arith.constant 52 : index
    %c0_28 = arith.constant 0 : index
    %72 = vector.load %arg2[%c52, %c0_28] : memref<80x128xf32, #tpu.memory_space<vmem>>, vector<8x2xf32>
    %cst_29 = arith.constant dense<0.000000e+00> : vector<32x8xf32>
    %73 = tpu.matmul %69, %70, %cst_29 {dimension_numbers = #tpu.dot_dimension_numbers<[1], [0], [0], [1], [0, 0, 1, 1], [], []>} : vector<32x16xf32>, vector<16x8xf32>, vector<32x8xf32> -> vector<32x8xf32>
    %cst_30 = arith.constant dense<0.000000e+00> : vector<32x2xf32>
    %74 = tpu.matmul %73, %72, %cst_30 {dimension_numbers = #tpu.dot_dimension_numbers<[1], [0], [0], [1], [0, 0, 1, 1], [], []>} : vector<32x8xf32>, vector<8x2xf32>, vector<32x2xf32> -> vector<32x2xf32>
    %cst_31 = arith.constant dense<0.000000e+00> : vector<2x32xf32>
    %75 = tpu.matmul %71, %73, %cst_31 {dimension_numbers = #tpu.dot_dimension_numbers<[1], [1], [0], [0], [0, 0, 1, 0], [], []>} : vector<2x8xf32>, vector<32x8xf32>, vector<2x32xf32> -> vector<2x32xf32>
    %76 = vector.extract_strided_slice %74 {offsets = [0, 0], sizes = [32, 1], strides = [1, 1]} : vector<32x2xf32> to vector<32x1xf32>
    %77 = vector.extract_strided_slice %75 {offsets = [0, 0], sizes = [1, 32], strides = [1, 1]} : vector<2x32xf32> to vector<1x32xf32>
    %78 = vector.broadcast %76 : vector<32x1xf32> to vector<32x32xf32>
    %79 = vector.broadcast %77 : vector<1x32xf32> to vector<32x32xf32>
    %80 = arith.addf %78, %79 : vector<32x32xf32>
    %cst_32 = arith.constant 0.000000e+00 : f32
    %81 = vector.broadcast %cst_32 : f32 to vector<32x32xf32>
    %82 = arith.cmpf oge, %80, %81 : vector<32x32xf32>
    %cst_33 = arith.constant 2.000000e-01 : f32
    %83 = vector.broadcast %cst_33 : f32 to vector<32x32xf32>
    %84 = arith.mulf %83, %80 : vector<32x32xf32>
    %85 = arith.select %82, %80, %84 : vector<32x32xi1>, vector<32x32xf32>
    %cst_34 = arith.constant -1.000000e+30 : f32
    %86 = vector.broadcast %cst_34 : f32 to vector<32x32xf32>
    %87 = arith.select %3, %85, %86 : vector<32x32xi1>, vector<32x32xf32>
    %cst_35 = arith.constant dense<0xFF800000> : vector<32xf32>
    %88 = vector.multi_reduction <maximumf>, %87, %cst_35 [1] : vector<32x32xf32> to vector<32xf32>
    %89 = vector.shape_cast %88 : vector<32xf32> to vector<32x1xf32>
    %90 = vector.broadcast %89 : vector<32x1xf32> to vector<32x32xf32>
    %91 = arith.subf %87, %90 : vector<32x32xf32>
    %92 = math.exp %91 : vector<32x32xf32>
    %cst_36 = arith.constant dense<0.000000e+00> : vector<32xf32>
    %93 = vector.multi_reduction <add>, %92, %cst_36 [1] : vector<32x32xf32> to vector<32xf32>
    %94 = vector.shape_cast %93 : vector<32xf32> to vector<32x1xf32>
    %cst_37 = arith.constant 1.000000e-30 : f32
    %95 = vector.broadcast %cst_37 : f32 to vector<32x1xf32>
    %96 = arith.maximumf %94, %95 : vector<32x1xf32>
    %97 = tpu.reciprocal %96 : vector<32x1xf32> -> vector<32x1xf32>
    %98 = vector.broadcast %97 : vector<32x1xf32> to vector<32x32xf32>
    %99 = arith.mulf %92, %98 : vector<32x32xf32>
    %100 = vector.extract_strided_slice %73 {offsets = [0, 0], sizes = [32, 4], strides = [1, 1]} : vector<32x8xf32> to vector<32x4xf32>
    %cst_38 = arith.constant dense<0.000000e+00> : vector<32x4xf32>
    %101 = tpu.matmul %99, %100, %cst_38 {dimension_numbers = #tpu.dot_dimension_numbers<[1], [0], [0], [1], [0, 0, 1, 1], [], []>} : vector<32x32xf32>, vector<32x4xf32>, vector<32x4xf32> -> vector<32x4xf32>
    %102 = vector.extract_strided_slice %74 {offsets = [0, 1], sizes = [32, 1], strides = [1, 1]} : vector<32x2xf32> to vector<32x1xf32>
    %103 = vector.extract_strided_slice %75 {offsets = [1, 0], sizes = [1, 32], strides = [1, 1]} : vector<2x32xf32> to vector<1x32xf32>
    %104 = vector.broadcast %102 : vector<32x1xf32> to vector<32x32xf32>
    %105 = vector.broadcast %103 : vector<1x32xf32> to vector<32x32xf32>
    %106 = arith.addf %104, %105 : vector<32x32xf32>
    %cst_39 = arith.constant 0.000000e+00 : f32
    %107 = vector.broadcast %cst_39 : f32 to vector<32x32xf32>
    %108 = arith.cmpf oge, %106, %107 : vector<32x32xf32>
    %cst_40 = arith.constant 2.000000e-01 : f32
    %109 = vector.broadcast %cst_40 : f32 to vector<32x32xf32>
    %110 = arith.mulf %109, %106 : vector<32x32xf32>
    %111 = arith.select %108, %106, %110 : vector<32x32xi1>, vector<32x32xf32>
    %cst_41 = arith.constant -1.000000e+30 : f32
    %112 = vector.broadcast %cst_41 : f32 to vector<32x32xf32>
    %113 = arith.select %3, %111, %112 : vector<32x32xi1>, vector<32x32xf32>
    %cst_42 = arith.constant dense<0xFF800000> : vector<32xf32>
    %114 = vector.multi_reduction <maximumf>, %113, %cst_42 [1] : vector<32x32xf32> to vector<32xf32>
    %115 = vector.shape_cast %114 : vector<32xf32> to vector<32x1xf32>
    %116 = vector.broadcast %115 : vector<32x1xf32> to vector<32x32xf32>
    %117 = arith.subf %113, %116 : vector<32x32xf32>
    %118 = math.exp %117 : vector<32x32xf32>
    %cst_43 = arith.constant dense<0.000000e+00> : vector<32xf32>
    %119 = vector.multi_reduction <add>, %118, %cst_43 [1] : vector<32x32xf32> to vector<32xf32>
    %120 = vector.shape_cast %119 : vector<32xf32> to vector<32x1xf32>
    %cst_44 = arith.constant 1.000000e-30 : f32
    %121 = vector.broadcast %cst_44 : f32 to vector<32x1xf32>
    %122 = arith.maximumf %120, %121 : vector<32x1xf32>
    %123 = tpu.reciprocal %122 : vector<32x1xf32> -> vector<32x1xf32>
    %124 = vector.broadcast %123 : vector<32x1xf32> to vector<32x32xf32>
    %125 = arith.mulf %118, %124 : vector<32x32xf32>
    %126 = vector.extract_strided_slice %73 {offsets = [0, 4], sizes = [32, 4], strides = [1, 1]} : vector<32x8xf32> to vector<32x4xf32>
    %cst_45 = arith.constant dense<0.000000e+00> : vector<32x4xf32>
    %127 = tpu.matmul %125, %126, %cst_45 {dimension_numbers = #tpu.dot_dimension_numbers<[1], [0], [0], [1], [0, 0, 1, 1], [], []>} : vector<32x32xf32>, vector<32x4xf32>, vector<32x4xf32> -> vector<32x4xf32>
    %128 = tpu.concatenate %101, %127 in 1 : vector<32x4xf32>, vector<32x4xf32> -> vector<32x8xf32>
    %cst_46 = arith.constant 0.000000e+00 : f32
    %129 = vector.broadcast %cst_46 : f32 to vector<32x8xf32>
    %130 = arith.cmpf ogt, %128, %129 : vector<32x8xf32>
    %131 = math.exp %128 : vector<32x8xf32>
    %cst_47 = arith.constant 1.000000e+00 : f32
    %132 = vector.broadcast %cst_47 : f32 to vector<32x8xf32>
    %133 = arith.subf %131, %132 : vector<32x8xf32>
    %134 = arith.select %130, %128, %133 : vector<32x8xi1>, vector<32x8xf32>
    %c60 = arith.constant 60 : index
    %c0_48 = arith.constant 0 : index
    %135 = vector.load %arg2[%c60, %c0_48] : memref<80x128xf32, #tpu.memory_space<vmem>>, vector<8x4xf32>
    %c68 = arith.constant 68 : index
    %c0_49 = arith.constant 0 : index
    %136 = vector.load %arg2[%c68, %c0_49] : memref<80x128xf32, #tpu.memory_space<vmem>>, vector<1x4xf32>
    %c69 = arith.constant 69 : index
    %c0_50 = arith.constant 0 : index
    %137 = vector.load %arg2[%c69, %c0_50] : memref<80x128xf32, #tpu.memory_space<vmem>>, vector<4x1xf32>
    %cst_51 = arith.constant dense<0.000000e+00> : vector<32x4xf32>
    %138 = tpu.matmul %134, %135, %cst_51 {dimension_numbers = #tpu.dot_dimension_numbers<[1], [0], [0], [1], [0, 0, 1, 1], [], []>} : vector<32x8xf32>, vector<8x4xf32>, vector<32x4xf32> -> vector<32x4xf32>
    %cst_52 = arith.constant dense<0.000000e+00> : vector<32x1xf32>
    %139 = tpu.matmul %138, %137, %cst_52 {dimension_numbers = #tpu.dot_dimension_numbers<[1], [0], [0], [1], [0, 0, 1, 1], [], []>} : vector<32x4xf32>, vector<4x1xf32>, vector<32x1xf32> -> vector<32x1xf32>
    %cst_53 = arith.constant dense<0.000000e+00> : vector<1x32xf32>
    %140 = tpu.matmul %136, %138, %cst_53 {dimension_numbers = #tpu.dot_dimension_numbers<[1], [1], [0], [0], [0, 0, 1, 0], [], []>} : vector<1x4xf32>, vector<32x4xf32>, vector<1x32xf32> -> vector<1x32xf32>
    %141 = vector.broadcast %139 : vector<32x1xf32> to vector<32x32xf32>
    %142 = vector.broadcast %140 : vector<1x32xf32> to vector<32x32xf32>
    %143 = arith.addf %141, %142 : vector<32x32xf32>
    %cst_54 = arith.constant 0.000000e+00 : f32
    %144 = vector.broadcast %cst_54 : f32 to vector<32x32xf32>
    %145 = arith.cmpf oge, %143, %144 : vector<32x32xf32>
    %cst_55 = arith.constant 2.000000e-01 : f32
    %146 = vector.broadcast %cst_55 : f32 to vector<32x32xf32>
    %147 = arith.mulf %146, %143 : vector<32x32xf32>
    %148 = arith.select %145, %143, %147 : vector<32x32xi1>, vector<32x32xf32>
    %cst_56 = arith.constant -1.000000e+30 : f32
    %149 = vector.broadcast %cst_56 : f32 to vector<32x32xf32>
    %150 = arith.select %3, %148, %149 : vector<32x32xi1>, vector<32x32xf32>
    %cst_57 = arith.constant dense<0xFF800000> : vector<32xf32>
    %151 = vector.multi_reduction <maximumf>, %150, %cst_57 [1] : vector<32x32xf32> to vector<32xf32>
    %152 = vector.shape_cast %151 : vector<32xf32> to vector<32x1xf32>
    %153 = vector.broadcast %152 : vector<32x1xf32> to vector<32x32xf32>
    %154 = arith.subf %150, %153 : vector<32x32xf32>
    %155 = math.exp %154 : vector<32x32xf32>
    %cst_58 = arith.constant dense<0.000000e+00> : vector<32xf32>
    %156 = vector.multi_reduction <add>, %155, %cst_58 [1] : vector<32x32xf32> to vector<32xf32>
    %157 = vector.shape_cast %156 : vector<32xf32> to vector<32x1xf32>
    %cst_59 = arith.constant 1.000000e-30 : f32
    %158 = vector.broadcast %cst_59 : f32 to vector<32x1xf32>
    %159 = arith.maximumf %157, %158 : vector<32x1xf32>
    %160 = tpu.reciprocal %159 : vector<32x1xf32> -> vector<32x1xf32>
    %161 = vector.broadcast %160 : vector<32x1xf32> to vector<32x32xf32>
    %162 = arith.mulf %155, %161 : vector<32x32xf32>
    %cst_60 = arith.constant dense<0.000000e+00> : vector<32x4xf32>
    %163 = tpu.matmul %162, %138, %cst_60 {dimension_numbers = #tpu.dot_dimension_numbers<[1], [0], [0], [1], [0, 0, 1, 1], [], []>} : vector<32x32xf32>, vector<32x4xf32>, vector<32x4xf32> -> vector<32x4xf32>
    %cst_61 = arith.constant 1.000000e+00 : f32
    %164 = vector.broadcast %cst_61 : f32 to vector<32x4xf32>
    %165 = arith.mulf %163, %164 : vector<32x4xf32>
    %166 = tpu.concatenate %165, %8, %73, %138, %162 in 1 : vector<32x4xf32>, vector<32x16xf32>, vector<32x8xf32>, vector<32x4xf32>, vector<32x32xf32> -> vector<32x64xf32>
    %cst_62 = arith.constant 0.000000e+00 : f32
    %167 = vector.broadcast %cst_62 : f32 to vector<32x64xf32>
    %168 = tpu.concatenate %166, %167 in 1 : vector<32x64xf32>, vector<32x64xf32> -> vector<32x128xf32>
    %c0_63 = arith.constant 0 : index
    %c0_64 = arith.constant 0 : index
    %169 = vector.load %arg3[%c0_63, %c0_64] : memref<32x128xf32, #tpu.memory_space<vmem>>, vector<32x128xf32>
    tpu.vector_store %arg3[%c0_63, %c0_64], %168 {strides = array<i32>} : memref<32x128xf32, #tpu.memory_space<vmem>>, vector<32x128xf32>,
    return
  }
}

</mosaic_0001>

<llo_original>
// kernel: deepgat_forward.1
$region0: #{deepgat_forward.1}
  #allocation0 [shape = 'u32[]', space=smem, size = 0x4, offset = 0x4, fixed_abs, tag = 'smem constant byte address 0x4 - core index']
  #allocation1 [shape = 'u32[144,128]{1,0:T(1,128)}', space=vmem, size = 0x12000, scoped, tag = 'internal scratch']
  %s0 = inlined_call_operand.vmem [shape: f32[32,16], index: 0, kind: input, shape index: {}]
  %s1 = inlined_call_operand.vmem [shape: s8[32,32], index: 1, kind: input, shape index: {}]
  %s2 = inlined_call_operand.vmem [shape: f32[80,128], index: 2, kind: input, shape index: {}]
  %s3 = inlined_call_operand.vmem [shape: f32[32,128], index: 3, kind: output, shape index: {}]
  %s4 = sld [smem:[#allocation0]]
  $region22: #{deepgat_forward.1} parent=0
    _
  %s6 = ssub.s32 1, %s4
  %s7 = scalar_select 0, %s6, %s4
  // Predicated region
  $region2: #{deepgat_forward.1} parent=0 // pred_check
    _
  $region3: #{deepgat_forward.1} parent=0 // pred_check_branch
    %9 = sbr.rel (0) target = $region5
  $region4: #{deepgat_forward.1} parent=0 // pred_region
    _
  $region5: #{deepgat_forward.1} parent=0 // pred_fallthru
    _
  // Predicated region
  $region6: #{deepgat_forward.1} parent=0 // pred_check
    _
  $region7: #{deepgat_forward.1} parent=0 // pred_check_branch
    %11 = sbr.rel (0) target = $region9
  $region8: #{deepgat_forward.1} parent=0 // pred_region
    _
  $region9: #{deepgat_forward.1} parent=0 // pred_fallthru
    _
  // Predicated region
  $region10: #{deepgat_forward.1} parent=0 // pred_check
    _
  $region11: #{deepgat_forward.1} parent=0 // pred_check_branch
    %13 = sbr.rel (0) target = $region13
  $region12: #{deepgat_forward.1} parent=0 // pred_region
    _
  $region13: #{deepgat_forward.1} parent=0 // pred_fallthru
    _
  %v14 = vld [vmem:[%s1] sm:$0xff]
  %v15 = vunpack.c.0.s8 %v14
  %v16 = vunpack.c.1.s8 %v14
  %v17 = vunpack.c.2.s8 %v14
  %v18 = vunpack.c.3.s8 %v14
  %v19 = vcvt.s32.f32 %v15
  %v20 = vcvt.s32.f32 %v16
  %v21 = vcvt.s32.f32 %v17
  %v22 = vcvt.s32.f32 %v18
  %vm23 = vcmp.gt.f32.partialorder %v19, 0.0
  %vm24 = vcmp.gt.f32.partialorder %v20, 0.0
  %vm25 = vcmp.gt.f32.partialorder %v21, 0.0
  %vm26 = vcmp.gt.f32.partialorder %v22, 0.0
  %v27 = vld [vmem:[%s0] sm:$0xff]
  %v28 = vld [vmem:[%s0 + $0x8] sm:$0xff]
  %v29 = vld [vmem:[%s0 + $0x10] sm:$0xff]
  %v30 = vld [vmem:[%s0 + $0x18] sm:$0xff]
  %v31 = vld [vmem:[%s2] sm:$0xff]
  %v32 = vld [vmem:[%s2 + $0x8] sm:$0xff]
  %v33 = vld [vmem:[%s2 + $0x10] sm:$0x3]
  %v34 = vld [vmem:[%s2 + $0x12] sm:$0xff]
  %v35 = vld [vmem:[%s2 + $0x1a] sm:$0xff]
  %vm36 = vcmask 130048
  %v38 = vsel %vm36, %v27, 0
  %v41 = vsel %vm36, %v28, 0
  %v44 = vsel %vm36, %v29, 0
  %v47 = vsel %vm36, %v30, 0
  %49 = vmatprep.subr.mxu0 0.0
  %50 = vmatpush1.msra.mxu0 %v31
  %51 = vmatprep.subr.mxu0 0.0
  %52 = vmatpush1.msra.mxu0 %v32
  %53 = vmatprep.subr.mxu0 0.0
  %54 = vmatpush1.msra.mxu0 0.0
  %55 = vmatprep.subr.mxu0 0.0
  %56 = vmatpush1.msra.mxu0 0.0
  %57 = vmatprep.subr.mxu0 0.0
  %58 = vmatpush1.msra.mxu0 0.0
  %59 = vmatprep.subr.mxu0 0.0
  %60 = vmatpush1.msra.mxu0 0.0
  %61 = vmatprep.subr.mxu0 0.0
  %62 = vmatpush1.msra.mxu0 0.0
  %63 = vmatprep.subr.mxu0 0.0
  %64 = vmatpush1.msra.mxu0 0.0
  %65 = vmatprep.subr.mxu0 0.0
  %66 = vmatpush1.msra.mxu0 0.0
  %67 = vmatprep.subr.mxu0 0.0
  %68 = vmatpush1.msra.mxu0 0.0
  %69 = vmatprep.subr.mxu0 0.0
  %70 = vmatpush1.msra.mxu0 0.0
  %71 = vmatprep.subr.mxu0 0.0
  %72 = vmatpush1.msra.mxu0 0.0
  %73 = vmatprep.subr.mxu0 0.0
  %74 = vmatpush1.msra.mxu0 0.0
  %75 = vmatprep.subr.mxu0 0.0
  %76 = vmatpush1.msra.mxu0 0.0
  %77 = vmatprep.subr.mxu0 0.0
  %78 = vmatpush1.msra.mxu0 0.0
  %79 = vmatprep.subr.mxu0 0.0
  %80 = vmatpush1.msra.mxu0 0.0
  %81 = vmatprep.subr.mxu0 0.0
  %82 = vmatpush1.msra.mxu0 0.0
  %83 = vmatprep.subr.mxu0 0.0
  %84 = vmatpush1.msra.mxu0 0.0
  %85 = vmatprep.subr.mxu0 0.0
  %86 = vmatpush1.msra.mxu0 0.0
  %87 = vmatprep.subr.mxu0 0.0
  %88 = vmatpush1.msra.mxu0 0.0
  %89 = vmatprep.subr.mxu0 0.0
  %90 = vmatpush1.msra.mxu0 0.0
  %91 = vmatprep.subr.mxu0 0.0
  %92 = vmatpush1.msra.mxu0 0.0
  %93 = vmatprep.subr.mxu0 0.0
  %94 = vmatpush1.msra.mxu0 0.0
  %95 = vmatprep.subr.mxu0 0.0
  %96 = vmatpush1.msra.mxu0 0.0
  %97 = vmatprep.subr.mxu0 0.0
  %98 = vmatpush1.msra.mxu0 0.0
  %99 = vmatprep.subr.mxu0 0.0
  %100 = vmatpush1.msra.mxu0 0.0
  %101 = vmatprep.subr.mxu0 0.0
  %102 = vmatpush1.msra.mxu0 0.0
  %103 = vmatprep.subr.mxu0 0.0
  %104 = vmatpush1.msra.mxu0 0.0
  %105 = vmatprep.subr.mxu0 0.0
  %106 = vmatpush1.msra.mxu0 0.0
  %107 = vmatprep.subr.mxu0 0.0
  %108 = vmatpush1.msra.mxu0 0.0
  %109 = vmatprep.subr.mxu0 0.0
  %110 = vmatpush1.msra.mxu0 0.0
  %111 = vmatprep.subr.mxu0 0.0
  %112 = vmatpush1.msra.mxu0 0.0
  %113 = vmatprep.mubr.f32.mxu0 0.0
  %114 = vmatmul.mubr.f32.gmra.mrb[0].mxu0 %v38
  %v115 = vpop.f32.mrb[0].mxu0
  %v116 = vadd.f32 0.0, %v115
  %v117 = vpop.f32.mrb[0].mxu0
  %118 = vmatprep.mubr.f32.mxu0 0.0
  %119 = vmatmul.mubr.f32.gmra.mrb[0].mxu0 %v41
  %v120 = vpop.f32.mrb[0].mxu0
  %v121 = vadd.f32 0.0, %v120
  %v122 = vpop.f32.mrb[0].mxu0
  %123 = vmatprep.mubr.f32.mxu0 0.0
  %124 = vmatmul.mubr.f32.gmra.mrb[0].mxu0 %v44
  %v125 = vpop.f32.mrb[0].mxu0
  %v126 = vadd.f32 0.0, %v125
  %v127 = vpop.f32.mrb[0].mxu0
  %128 = vmatprep.mubr.f32.mxu0 0.0
  %129 = vmatmul.mubr.f32.gmra.mrb[0].mxu0 %v47
  %v130 = vpop.f32.mrb[0].mxu0
  %v131 = vadd.f32 0.0, %v130
  %v132 = vpop.f32.mrb[0].mxu0
  %133 = vdwg.mxu0
  %v135 = vsel %vm36, %v116, 0
  %v138 = vsel %vm36, %v121, 0
  %v141 = vsel %vm36, %v126, 0
  %v144 = vsel %vm36, %v131, 0
  %146 = vmatprep.subr.mxu0 0.0
  %147 = vmatpush1.msra.mxu0 %v34
  %148 = vmatprep.subr.mxu0 0.0
  %149 = vmatpush1.msra.mxu0 %v35
  %150 = vmatprep.subr.mxu0 0.0
  %151 = vmatpush1.msra.mxu0 0.0
  %152 = vmatprep.subr.mxu0 0.0
  %153 = vmatpush1.msra.mxu0 0.0
  %154 = vmatprep.subr.mxu0 0.0
  %155 = vmatpush1.msra.mxu0 0.0
  %156 = vmatprep.subr.mxu0 0.0
  %157 = vmatpush1.msra.mxu0 0.0
  %158 = vmatprep.subr.mxu0 0.0
  %159 = vmatpush1.msra.mxu0 0.0
  %160 = vmatprep.subr.mxu0 0.0
  %161 = vmatpush1.msra.mxu0 0.0
  %162 = vmatprep.subr.mxu0 0.0
  %163 = vmatpush1.msra.mxu0 0.0
  %164 = vmatprep.subr.mxu0 0.0
  %165 = vmatpush1.msra.mxu0 0.0
  %166 = vmatprep.subr.mxu0 0.0
  %167 = vmatpush1.msra.mxu0 0.0
  %168 = vmatprep.subr.mxu0 0.0
  %169 = vmatpush1.msra.mxu0 0.0
  %170 = vmatprep.subr.mxu0 0.0
  %171 = vmatpush1.msra.mxu0 0.0
  %172 = vmatprep.subr.mxu0 0.0
  %173 = vmatpush1.msra.mxu0 0.0
  %174 = vmatprep.subr.mxu0 0.0
  %175 = vmatpush1.msra.mxu0 0.0
  %176 = vmatprep.subr.mxu0 0.0
  %177 = vmatpush1.msra.mxu0 0.0
  %178 = vmatprep.subr.mxu0 0.0
  %179 = vmatpush1.msra.mxu0 0.0
  %180 = vmatprep.subr.mxu0 0.0
  %181 = vmatpush1.msra.mxu0 0.0
  %182 = vmatprep.subr.mxu0 0.0
  %183 = vmatpush1.msra.mxu0 0.0
  %184 = vmatprep.subr.mxu0 0.0
  %185 = vmatpush1.msra.mxu0 0.0
  %186 = vmatprep.subr.mxu0 0.0
  %187 = vmatpush1.msra.mxu0 0.0
  %188 = vmatprep.subr.mxu0 0.0
  %189 = vmatpush1.msra.mxu0 0.0
  %190 = vmatprep.subr.mxu0 0.0
  %191 = vmatpush1.msra.mxu0 0.0
  %192 = vmatprep.subr.mxu0 0.0
  %193 = vmatpush1.msra.mxu0 0.0
  %194 = vmatprep.subr.mxu0 0.0
  %195 = vmatpush1.msra.mxu0 0.0
  %196 = vmatprep.subr.mxu0 0.0
  %197 = vmatpush1.msra.mxu0 0.0
  %198 = vmatprep.subr.mxu0 0.0
  %199 = vmatpush1.msra.mxu0 0.0
  %200 = vmatprep.subr.mxu0 0.0
  %201 = vmatpush1.msra.mxu0 0.0
  %202 = vmatprep.subr.mxu0 0.0
  %203 = vmatpush1.msra.mxu0 0.0
  %204 = vmatprep.subr.mxu0 0.0
  %205 = vmatpush1.msra.mxu0 0.0
  %206 = vmatprep.subr.mxu0 0.0
  %207 = vmatpush1.msra.mxu0 0.0
  %208 = vmatprep.subr.mxu0 0.0
  %209 = vmatpush1.msra.mxu0 0.0
  %210 = vmatprep.mubr.f32.mxu0 0.0
  %211 = vmatmul.mubr.f32.gmra.mrb[0].mxu0 %v135
  %v212 = vpop.f32.mrb[0].mxu0
  %v213 = vadd.f32 0.0, %v212
  %v214 = vpop.f32.mrb[0].mxu0
  %215 = vmatprep.mubr.f32.mxu0 0.0
  %216 = vmatmul.mubr.f32.gmra.mrb[0].mxu0 %v138
  %v217 = vpop.f32.mrb[0].mxu0
  %v218 = vadd.f32 0.0, %v217
  %v219 = vpop.f32.mrb[0].mxu0
  %220 = vmatprep.mubr.f32.mxu0 0.0
  %221 = vmatmul.mubr.f32.gmra.mrb[0].mxu0 %v141
  %v222 = vpop.f32.mrb[0].mxu0
  %v223 = vadd.f32 0.0, %v222
  %v224 = vpop.f32.mrb[0].mxu0
  %225 = vmatprep.mubr.f32.mxu0 0.0
  %226 = vmatmul.mubr.f32.gmra.mrb[0].mxu0 %v144
  %v227 = vpop.f32.mrb[0].mxu0
  %v228 = vadd.f32 0.0, %v227
  %v229 = vpop.f32.mrb[0].mxu0
  %230 = vdwg.mxu0
  %v232 = vsel %vm36, %v33, 0
  %234 = vmatprep.subr.mxu0 0.0
  %235 = vmatpush1.xpose.msra.mxu0 %v135
  %236 = vmatprep.subr.mxu0 0.0
  %237 = vmatpush1.xpose.msra.mxu0 %v138
  %238 = vmatprep.subr.mxu0 0.0
  %239 = vmatpush1.xpose.msra.mxu0 %v141
  %240 = vmatprep.subr.mxu0 0.0
  %241 = vmatpush1.xpose.msra.mxu0 %v144
  %242 = vmatprep.subr.mxu0 0.0
  %243 = vmatpush1.xpose.msra.mxu0 0.0
  %244 = vmatprep.subr.mxu0 0.0
  %245 = vmatpush1.xpose.msra.mxu0 0.0
  %246 = vmatprep.subr.mxu0 0.0
  %247 = vmatpush1.xpose.msra.mxu0 0.0
  %248 = vmatprep.subr.mxu0 0.0
  %249 = vmatpush1.xpose.msra.mxu0 0.0
  %250 = vmatprep.subr.mxu0 0.0
  %251 = vmatpush1.xpose.msra.mxu0 0.0
  %252 = vmatprep.subr.mxu0 0.0
  %253 = vmatpush1.xpose.msra.mxu0 0.0
  %254 = vmatprep.subr.mxu0 0.0
  %255 = vmatpush1.xpose.msra.mxu0 0.0
  %256 = vmatprep.subr.mxu0 0.0
  %257 = vmatpush1.xpose.msra.mxu0 0.0
  %258 = vmatprep.subr.mxu0 0.0
  %259 = vmatpush1.xpose.msra.mxu0 0.0
  %260 = vmatprep.subr.mxu0 0.0
  %261 = vmatpush1.xpose.msra.mxu0 0.0
  %262 = vmatprep.subr.mxu0 0.0
  %263 = vmatpush1.xpose.msra.mxu0 0.0
  %264 = vmatprep.subr.mxu0 0.0
  %265 = vmatpush1.xpose.msra.mxu0 0.0
  %266 = vmatprep.subr.mxu0 0.0
  %267 = vmatpush1.xpose.msra.mxu0 0.0
  %268 = vmatprep.subr.mxu0 0.0
  %269 = vmatpush1.xpose.msra.mxu0 0.0
  %270 = vmatprep.subr.mxu0 0.0
  %271 = vmatpush1.xpose.msra.mxu0 0.0
  %272 = vmatprep.subr.mxu0 0.0
  %273 = vmatpush1.xpose.msra.mxu0 0.0
  %274 = vmatprep.subr.mxu0 0.0
  %275 = vmatpush1.xpose.msra.mxu0 0.0
  %276 = vmatprep.subr.mxu0 0.0
  %277 = vmatpush1.xpose.msra.mxu0 0.0
  %278 = vmatprep.subr.mxu0 0.0
  %279 = vmatpush1.xpose.msra.mxu0 0.0
  %280 = vmatprep.subr.mxu0 0.0
  %281 = vmatpush1.xpose.msra.mxu0 0.0
  %282 = vmatprep.subr.mxu0 0.0
  %283 = vmatpush1.xpose.msra.mxu0 0.0
  %284 = vmatprep.subr.mxu0 0.0
  %285 = vmatpush1.xpose.msra.mxu0 0.0
  %286 = vmatprep.subr.mxu0 0.0
  %287 = vmatpush1.xpose.msra.mxu0 0.0
  %288 = vmatprep.subr.mxu0 0.0
  %289 = vmatpush1.xpose.msra.mxu0 0.0
  %290 = vmatprep.subr.mxu0 0.0
  %291 = vmatpush1.xpose.msra.mxu0 0.0
  %292 = vmatprep.subr.mxu0 0.0
  %293 = vmatpush1.xpose.msra.mxu0 0.0
  %294 = vmatprep.subr.mxu0 0.0
  %295 = vmatpush1.xpose.msra.mxu0 0.0
  %296 = vmatprep.subr.mxu0 0.0
  %297 = vmatpush1.xpose.msra.mxu0 0.0
  %298 = vmatprep.mubr.f32.mxu0 0.0
  %299 = vmatmul.mubr.f32.gmra.mrb[0].mxu0 %v232
  %v300 = vpop.f32.mrb[0].mxu0
  %v301 = vadd.f32 0.0, %v300
  %v302 = vpop.f32.mrb[0].mxu0
  %303 = vdwg.mxu0
  %305 = vset.pattern.permute.xlu0 0
  %306 = vperm.xlu0 %305, %v213
  %v307 = vpop.permute.xlu0 %306
  %310 = vset.pattern.permute.xlu0 0
  %311 = vperm.xlu0 %310, %v218
  %v312 = vpop.permute.xlu0 %311
  %315 = vset.pattern.permute.xlu0 0
  %316 = vperm.xlu0 %315, %v223
  %v317 = vpop.permute.xlu0 %316
  %320 = vset.pattern.permute.xlu0 0
  %321 = vperm.xlu0 %320, %v228
  %v322 = vpop.permute.xlu0 %321
  %v324 = vlaneseq
  %v325 = vshrl.u32 %v324, 7
  %v326 = vsub.s32 0, %v325
  %v327 = vrot.slane %v301, %v326
  %v328 = vadd.f32 %v307, %v327
  %v329 = vadd.f32 %v312, %v327
  %v330 = vadd.f32 %v317, %v327
  %v331 = vadd.f32 %v322, %v327
  %vm332 = vcmp.ge.f32.partialorder %v328, 0.0
  %vm333 = vcmp.ge.f32.partialorder %v329, 0.0
  %vm334 = vcmp.ge.f32.partialorder %v330, 0.0
  %vm335 = vcmp.ge.f32.partialorder %v331, 0.0
  %v336 = vmul.f32 %v328, 0.2
  %v337 = vmul.f32 %v329, 0.2
  %v338 = vmul.f32 %v330, 0.2
  %v339 = vmul.f32 %v331, 0.2
  %v340 = vsel %vm332, %v328, %v336
  %v341 = vsel %vm333, %v329, %v337
  %v342 = vsel %vm334, %v330, %v338
  %v343 = vsel %vm335, %v331, %v339
  %v344 = vsel %vm23, %v340, -1e+30
  %v345 = vsel %vm24, %v341, -1e+30
  %v346 = vsel %vm25, %v342, -1e+30
  %v347 = vsel %vm26, %v343, -1e+30
  %vm348 = vcmask 261120
  %v349 = vsel %vm348, %v344, -inf
  %350 = vmax.xlane.f32.xlu0 %v349
  %v351 = vpop.xlane.xlu0 %350
  %v352 = vsel %vm348, %v345, -inf
  %353 = vmax.xlane.f32.xlu0 %v352
  %v354 = vpop.xlane.xlu0 %353
  %v355 = vsel %vm348, %v346, -inf
  %356 = vmax.xlane.f32.xlu0 %v355
  %v357 = vpop.xlane.xlu0 %356
  %v358 = vsel %vm348, %v347, -inf
  %359 = vmax.xlane.f32.xlu0 %v358
  %v360 = vpop.xlane.xlu0 %359
  %v361 = vsub.f32 %v344, %v351
  %v362 = vsub.f32 %v345, %v354
  %v363 = vsub.f32 %v346, %v357
  %v364 = vsub.f32 %v347, %v360
  %v365 = vmul.f32 %v361, 1.442695
  %v366 = vpow.pop %v365
  %v367 = vmul.f32 %v362, 1.442695
  %v368 = vpow.pop %v367
  %v369 = vmul.f32 %v363, 1.442695
  %v370 = vpow.pop %v369
  %v371 = vmul.f32 %v364, 1.442695
  %v372 = vpow.pop %v371
  %v373 = vsel %vm348, %v366, 0.0
  %374 = vadd.xlane.f32.xlu0 %v373
  %v375 = vpop.xlane.xlu0 %374
  %v376 = vsel %vm348, %v368, 0.0
  %377 = vadd.xlane.f32.xlu0 %v376
  %v378 = vpop.xlane.xlu0 %377
  %v379 = vsel %vm348, %v370, 0.0
  %380 = vadd.xlane.f32.xlu0 %v379
  %v381 = vpop.xlane.xlu0 %380
  %v382 = vsel %vm348, %v372, 0.0
  %383 = vadd.xlane.f32.xlu0 %v382
  %v384 = vpop.xlane.xlu0 %383
  %v385 = vmax.f32 %v375, 1e-30
  %v386 = vmax.f32 %v378, 1e-30
  %v387 = vmax.f32 %v381, 1e-30
  %v388 = vmax.f32 %v384, 1e-30
  %v389 = vrcp.pop %v385
  %v390 = vrcp.pop %v386
  %v391 = vrcp.pop %v387
  %v392 = vrcp.pop %v388
  %v393 = vmul.f32 %v366, %v389
  %v394 = vmul.f32 %v368, %v390
  %v395 = vmul.f32 %v370, %v391
  %v396 = vmul.f32 %v372, %v392
  %v398 = vsel %vm348, %v393, 0
  %v401 = vsel %vm348, %v394, 0
  %v404 = vsel %vm348, %v395, 0
  %v407 = vsel %vm348, %v396, 0
  %409 = vmatprep.subr.mxu0 0.0
  %410 = vmatpush1.msra.mxu0 %v116
  %411 = vmatprep.subr.mxu0 0.0
  %412 = vmatpush1.msra.mxu0 %v121
  %413 = vmatprep.subr.mxu0 0.0
  %414 = vmatpush1.msra.mxu0 %v126
  %415 = vmatprep.subr.mxu0 0.0
  %416 = vmatpush1.msra.mxu0 %v131
  %417 = vmatprep.subr.mxu0 0.0
  %418 = vmatpush1.msra.mxu0 0.0
  %419 = vmatprep.subr.mxu0 0.0
  %420 = vmatpush1.msra.mxu0 0.0
  %421 = vmatprep.subr.mxu0 0.0
  %422 = vmatpush1.msra.mxu0 0.0
  %423 = vmatprep.subr.mxu0 0.0
  %424 = vmatpush1.msra.mxu0 0.0
  %425 = vmatprep.subr.mxu0 0.0
  %426 = vmatpush1.msra.mxu0 0.0
  %427 = vmatprep.subr.mxu0 0.0
  %428 = vmatpush1.msra.mxu0 0.0
  %429 = vmatprep.subr.mxu0 0.0
  %430 = vmatpush1.msra.mxu0 0.0
  %431 = vmatprep.subr.mxu0 0.0
  %432 = vmatpush1.msra.mxu0 0.0
  %433 = vmatprep.subr.mxu0 0.0
  %434 = vmatpush1.msra.mxu0 0.0
  %435 = vmatprep.subr.mxu0 0.0
  %436 = vmatpush1.msra.mxu0 0.0
  %437 = vmatprep.subr.mxu0 0.0
  %438 = vmatpush1.msra.mxu0 0.0
  %439 = vmatprep.subr.mxu0 0.0
  %440 = vmatpush1.msra.mxu0 0.0
  %441 = vmatprep.subr.mxu0 0.0
  %442 = vmatpush1.msra.mxu0 0.0
  %443 = vmatprep.subr.mxu0 0.0
  %444 = vmatpush1.msra.mxu0 0.0
  %445 = vmatprep.subr.mxu0 0.0
  %446 = vmatpush1.msra.mxu0 0.0
  %447 = vmatprep.subr.mxu0 0.0
  %448 = vmatpush1.msra.mxu0 0.0
  %449 = vmatprep.subr.mxu0 0.0
  %450 = vmatpush1.msra.mxu0 0.0
  %451 = vmatprep.subr.mxu0 0.0
  %452 = vmatpush1.msra.mxu0 0.0
  %453 = vmatprep.subr.mxu0 0.0
  %454 = vmatpush1.msra.mxu0 0.0
  %455 = vmatprep.subr.mxu0 0.0
  %456 = vmatpush1.msra.mxu0 0.0
  %457 = vmatprep.subr.mxu0 0.0
  %458 = vmatpush1.msra.mxu0 0.0
  %459 = vmatprep.subr.mxu0 0.0
  %460 = vmatpush1.msra.mxu0 0.0
  %461 = vmatprep.subr.mxu0 0.0
  %462 = vmatpush1.msra.mxu0 0.0
  %463 = vmatprep.subr.mxu0 0.0
  %464 = vmatpush1.msra.mxu0 0.0
  %465 = vmatprep.subr.mxu0 0.0
  %466 = vmatpush1.msra.mxu0 0.0
  %467 = vmatprep.subr.mxu0 0.0
  %468 = vmatpush1.msra.mxu0 0.0
  %469 = vmatprep.subr.mxu0 0.0
  %470 = vmatpush1.msra.mxu0 0.0
  %471 = vmatprep.subr.mxu0 0.0
  %472 = vmatpush1.msra.mxu0 0.0
  %473 = vmatprep.mubr.f32.mxu0 0.0
  %474 = vmatmul.mubr.f32.gmra.mrb[0].mxu0 %v398
  %v475 = vpop.f32.mrb[0].mxu0
  %v476 = vadd.f32 0.0, %v475
  %v477 = vpop.f32.mrb[0].mxu0
  %478 = vmatprep.mubr.f32.mxu0 0.0
  %479 = vmatmul.mubr.f32.gmra.mrb[0].mxu0 %v401
  %v480 = vpop.f32.mrb[0].mxu0
  %v481 = vadd.f32 0.0, %v480
  %v482 = vpop.f32.mrb[0].mxu0
  %483 = vmatprep.mubr.f32.mxu0 0.0
  %484 = vmatmul.mubr.f32.gmra.mrb[0].mxu0 %v404
  %v485 = vpop.f32.mrb[0].mxu0
  %v486 = vadd.f32 0.0, %v485
  %v487 = vpop.f32.mrb[0].mxu0
  %488 = vmatprep.mubr.f32.mxu0 0.0
  %489 = vmatmul.mubr.f32.gmra.mrb[0].mxu0 %v407
  %v490 = vpop.f32.mrb[0].mxu0
  %v491 = vadd.f32 0.0, %v490
  %v492 = vpop.f32.mrb[0].mxu0
  %493 = vdwg.mxu0
  %494 = vset.pattern.permute.xlu0 1
  %495 = vperm.xlu0 %494, %v213
  %v496 = vpop.permute.xlu0 %495
  %498 = vset.pattern.permute.xlu0 1
  %499 = vperm.xlu0 %498, %v218
  %v500 = vpop.permute.xlu0 %499
  %502 = vset.pattern.permute.xlu0 1
  %503 = vperm.xlu0 %502, %v223
  %v504 = vpop.permute.xlu0 %503
  %506 = vset.pattern.permute.xlu0 1
  %507 = vperm.xlu0 %506, %v228
  %v508 = vpop.permute.xlu0 %507
  %v510 = vlaneseq
  %v511 = vshrl.u32 %v510, 7
  %v512 = vsub.s32 1, %v511
  %v513 = vrot.slane %v301, %v512
  %v514 = vadd.f32 %v496, %v513
  %v515 = vadd.f32 %v500, %v513
  %v516 = vadd.f32 %v504, %v513
  %v517 = vadd.f32 %v508, %v513
  %vm518 = vcmp.ge.f32.partialorder %v514, 0.0
  %vm519 = vcmp.ge.f32.partialorder %v515, 0.0
  %vm520 = vcmp.ge.f32.partialorder %v516, 0.0
  %vm521 = vcmp.ge.f32.partialorder %v517, 0.0
  %v522 = vmul.f32 %v514, 0.2
  %v523 = vmul.f32 %v515, 0.2
  %v524 = vmul.f32 %v516, 0.2
  %v525 = vmul.f32 %v517, 0.2
  %v526 = vsel %vm518, %v514, %v522
  %v527 = vsel %vm519, %v515, %v523
  %v528 = vsel %vm520, %v516, %v524
  %v529 = vsel %vm521, %v517, %v525
  %v530 = vsel %vm23, %v526, -1e+30
  %v531 = vsel %vm24, %v527, -1e+30
  %v532 = vsel %vm25, %v528, -1e+30
  %v533 = vsel %vm26, %v529, -1e+30
  %v534 = vsel %vm348, %v530, -inf
  %535 = vmax.xlane.f32.xlu0 %v534
  %v536 = vpop.xlane.xlu0 %535
  %v537 = vsel %vm348, %v531, -inf
  %538 = vmax.xlane.f32.xlu0 %v537
  %v539 = vpop.xlane.xlu0 %538
  %v540 = vsel %vm348, %v532, -inf
  %541 = vmax.xlane.f32.xlu0 %v540
  %v542 = vpop.xlane.xlu0 %541
  %v543 = vsel %vm348, %v533, -inf
  %544 = vmax.xlane.f32.xlu0 %v543
  %v545 = vpop.xlane.xlu0 %544
  %v546 = vsub.f32 %v530, %v536
  %v547 = vsub.f32 %v531, %v539
  %v548 = vsub.f32 %v532, %v542
  %v549 = vsub.f32 %v533, %v545
  %v550 = vmul.f32 %v546, 1.442695
  %v551 = vpow.pop %v550
  %v552 = vmul.f32 %v547, 1.442695
  %v553 = vpow.pop %v552
  %v554 = vmul.f32 %v548, 1.442695
  %v555 = vpow.pop %v554
  %v556 = vmul.f32 %v549, 1.442695
  %v557 = vpow.pop %v556
  %v558 = vsel %vm348, %v551, 0.0
  %559 = vadd.xlane.f32.xlu0 %v558
  %v560 = vpop.xlane.xlu0 %559
  %v561 = vsel %vm348, %v553, 0.0
  %562 = vadd.xlane.f32.xlu0 %v561
  %v563 = vpop.xlane.xlu0 %562
  %v564 = vsel %vm348, %v555, 0.0
  %565 = vadd.xlane.f32.xlu0 %v564
  %v566 = vpop.xlane.xlu0 %565
  %v567 = vsel %vm348, %v557, 0.0
  %568 = vadd.xlane.f32.xlu0 %v567
  %v569 = vpop.xlane.xlu0 %568
  %v570 = vmax.f32 %v560, 1e-30
  %v571 = vmax.f32 %v563, 1e-30
  %v572 = vmax.f32 %v566, 1e-30
  %v573 = vmax.f32 %v569, 1e-30
  %v574 = vrcp.pop %v570
  %v575 = vrcp.pop %v571
  %v576 = vrcp.pop %v572
  %v577 = vrcp.pop %v573
  %v578 = vmul.f32 %v551, %v574
  %v579 = vmul.f32 %v553, %v575
  %v580 = vmul.f32 %v555, %v576
  %v581 = vmul.f32 %v557, %v577
  %582 = vrot.lane.b32.xlu0 %v116, 120
  %v583 = vpop.permute.xlu0 %582
  %584 = vrot.lane.b32.xlu0 %v121, 120
  %v585 = vpop.permute.xlu0 %584
  %586 = vrot.lane.b32.xlu0 %v126, 120
  %v587 = vpop.permute.xlu0 %586
  %588 = vrot.lane.b32.xlu0 %v131, 120
  %v589 = vpop.permute.xlu0 %588
  %v595 = vsel %vm348, %v578, 0
  %v598 = vsel %vm348, %v579, 0
  %v601 = vsel %vm348, %v580, 0
  %v604 = vsel %vm348, %v581, 0
  %606 = vmatprep.subr.mxu0 0.0
  %607 = vmatpush1.msra.mxu0 %v583
  %608 = vmatprep.subr.mxu0 0.0
  %609 = vmatpush1.msra.mxu0 %v585
  %610 = vmatprep.subr.mxu0 0.0
  %611 = vmatpush1.msra.mxu0 %v587
  %612 = vmatprep.subr.mxu0 0.0
  %613 = vmatpush1.msra.mxu0 %v589
  %614 = vmatprep.subr.mxu0 0.0
  %615 = vmatpush1.msra.mxu0 0.0
  %616 = vmatprep.subr.mxu0 0.0
  %617 = vmatpush1.msra.mxu0 0.0
  %618 = vmatprep.subr.mxu0 0.0
  %619 = vmatpush1.msra.mxu0 0.0
  %620 = vmatprep.subr.mxu0 0.0
  %621 = vmatpush1.msra.mxu0 0.0
  %622 = vmatprep.subr.mxu0 0.0
  %623 = vmatpush1.msra.mxu0 0.0
  %624 = vmatprep.subr.mxu0 0.0
  %625 = vmatpush1.msra.mxu0 0.0
  %626 = vmatprep.subr.mxu0 0.0
  %627 = vmatpush1.msra.mxu0 0.0
  %628 = vmatprep.subr.mxu0 0.0
  %629 = vmatpush1.msra.mxu0 0.0
  %630 = vmatprep.subr.mxu0 0.0
  %631 = vmatpush1.msra.mxu0 0.0
  %632 = vmatprep.subr.mxu0 0.0
  %633 = vmatpush1.msra.mxu0 0.0
  %634 = vmatprep.subr.mxu0 0.0
  %635 = vmatpush1.msra.mxu0 0.0
  %636 = vmatprep.subr.mxu0 0.0
  %637 = vmatpush1.msra.mxu0 0.0
  %638 = vmatprep.subr.mxu0 0.0
  %639 = vmatpush1.msra.mxu0 0.0
  %640 = vmatprep.subr.mxu0 0.0
  %641 = vmatpush1.msra.mxu0 0.0
  %642 = vmatprep.subr.mxu0 0.0
  %643 = vmatpush1.msra.mxu0 0.0
  %644 = vmatprep.subr.mxu0 0.0
  %645 = vmatpush1.msra.mxu0 0.0
  %646 = vmatprep.subr.mxu0 0.0
  %647 = vmatpush1.msra.mxu0 0.0
  %648 = vmatprep.subr.mxu0 0.0
  %649 = vmatpush1.msra.mxu0 0.0
  %650 = vmatprep.subr.mxu0 0.0
  %651 = vmatpush1.msra.mxu0 0.0
  %652 = vmatprep.subr.mxu0 0.0
  %653 = vmatpush1.msra.mxu0 0.0
  %654 = vmatprep.subr.mxu0 0.0
  %655 = vmatpush1.msra.mxu0 0.0
  %656 = vmatprep.subr.mxu0 0.0
  %657 = vmatpush1.msra.mxu0 0.0
  %658 = vmatprep.subr.mxu0 0.0
  %659 = vmatpush1.msra.mxu0 0.0
  %660 = vmatprep.subr.mxu0 0.0
  %661 = vmatpush1.msra.mxu0 0.0
  %662 = vmatprep.subr.mxu0 0.0
  %663 = vmatpush1.msra.mxu0 0.0
  %664 = vmatprep.subr.mxu0 0.0
  %665 = vmatpush1.msra.mxu0 0.0
  %666 = vmatprep.subr.mxu0 0.0
  %667 = vmatpush1.msra.mxu0 0.0
  %668 = vmatprep.subr.mxu0 0.0
  %669 = vmatpush1.msra.mxu0 0.0
  %670 = vmatprep.mubr.f32.mxu0 0.0
  %671 = vmatmul.mubr.f32.gmra.mrb[0].mxu0 %v595
  %v672 = vpop.f32.mrb[0].mxu0
  %v673 = vadd.f32 0.0, %v672
  %v674 = vpop.f32.mrb[0].mxu0
  %675 = vmatprep.mubr.f32.mxu0 0.0
  %676 = vmatmul.mubr.f32.gmra.mrb[0].mxu0 %v598
  %v677 = vpop.f32.mrb[0].mxu0
  %v678 = vadd.f32 0.0, %v677
  %v679 = vpop.f32.mrb[0].mxu0
  %680 = vmatprep.mubr.f32.mxu0 0.0
  %681 = vmatmul.mubr.f32.gmra.mrb[0].mxu0 %v601
  %v682 = vpop.f32.mrb[0].mxu0
  %v683 = vadd.f32 0.0, %v682
  %v684 = vpop.f32.mrb[0].mxu0
  %685 = vmatprep.mubr.f32.mxu0 0.0
  %686 = vmatmul.mubr.f32.gmra.mrb[0].mxu0 %v604
  %v687 = vpop.f32.mrb[0].mxu0
  %v688 = vadd.f32 0.0, %v687
  %v689 = vpop.f32.mrb[0].mxu0
  %690 = vdwg.mxu0
  %695 = vrot.lane.b32.xlu0 %v673, 8
  %v696 = vpop.permute.xlu0 %695
  %697 = vrot.lane.b32.xlu0 %v678, 8
  %v698 = vpop.permute.xlu0 %697
  %699 = vrot.lane.b32.xlu0 %v683, 8
  %v700 = vpop.permute.xlu0 %699
  %701 = vrot.lane.b32.xlu0 %v688, 8
  %v702 = vpop.permute.xlu0 %701
  %vm707 = vcmask 64512
  %v708 = vsel %vm707, %v476, %v696
  %v709 = vsel %vm707, %v481, %v698
  %v710 = vsel %vm707, %v486, %v700
  %v711 = vsel %vm707, %v491, %v702
  %vm712 = vcmp.gt.f32.partialorder %v708, 0.0
  %vm713 = vcmp.gt.f32.partialorder %v709, 0.0
  %vm714 = vcmp.gt.f32.partialorder %v710, 0.0
  %vm715 = vcmp.gt.f32.partialorder %v711, 0.0
  %v716 = vmul.f32 %v708, 1.442695
  %v717 = vpow.pop %v716
  %v718 = vmul.f32 %v709, 1.442695
  %v719 = vpow.pop %v718
  %v720 = vmul.f32 %v710, 1.442695
  %v721 = vpow.pop %v720
  %v722 = vmul.f32 %v711, 1.442695
  %v723 = vpow.pop %v722
  %v724 = vsub.f32 %v717, 1.0
  %v725 = vsub.f32 %v719, 1.0
  %v726 = vsub.f32 %v721, 1.0
  %v727 = vsub.f32 %v723, 1.0
  %v728 = vsel %vm712, %v708, %v724
  %v729 = vsel %vm713, %v709, %v725
  %v730 = vsel %vm714, %v710, %v726
  %v731 = vsel %vm715, %v711, %v727
  %v732 = vld [vmem:[%s2 + $0x22] sm:$0xff]
  %v733 = vld [vmem:[%s2 + $0x2a] sm:$0xff]
  %v734 = vld [vmem:[%s2 + $0x32] sm:$0x3]
  %v735 = vld [vmem:[%s2 + $0x34] sm:$0xff]
  %v737 = vsel %vm36, %v728, 0
  %v740 = vsel %vm36, %v729, 0
  %v743 = vsel %vm36, %v730, 0
  %v746 = vsel %vm36, %v731, 0
  %748 = vmatprep.subr.mxu0 0.0
  %749 = vmatpush1.msra.mxu0 %v732
  %750 = vmatprep.subr.mxu0 0.0
  %751 = vmatpush1.msra.mxu0 %v733
  %752 = vmatprep.subr.mxu0 0.0
  %753 = vmatpush1.msra.mxu0 0.0
  %754 = vmatprep.subr.mxu0 0.0
  %755 = vmatpush1.msra.mxu0 0.0
  %756 = vmatprep.subr.mxu0 0.0
  %757 = vmatpush1.msra.mxu0 0.0
  %758 = vmatprep.subr.mxu0 0.0
  %759 = vmatpush1.msra.mxu0 0.0
  %760 = vmatprep.subr.mxu0 0.0
  %761 = vmatpush1.msra.mxu0 0.0
  %762 = vmatprep.subr.mxu0 0.0
  %763 = vmatpush1.msra.mxu0 0.0
  %764 = vmatprep.subr.mxu0 0.0
  %765 = vmatpush1.msra.mxu0 0.0
  %766 = vmatprep.subr.mxu0 0.0
  %767 = vmatpush1.msra.mxu0 0.0
  %768 = vmatprep.subr.mxu0 0.0
  %769 = vmatpush1.msra.mxu0 0.0
  %770 = vmatprep.subr.mxu0 0.0
  %771 = vmatpush1.msra.mxu0 0.0
  %772 = vmatprep.subr.mxu0 0.0
  %773 = vmatpush1.msra.mxu0 0.0
  %774 = vmatprep.subr.mxu0 0.0
  %775 = vmatpush1.msra.mxu0 0.0
  %776 = vmatprep.subr.mxu0 0.0
  %777 = vmatpush1.msra.mxu0 0.0
  %778 = vmatprep.subr.mxu0 0.0
  %779 = vmatpush1.msra.mxu0 0.0
  %780 = vmatprep.subr.mxu0 0.0
  %781 = vmatpush1.msra.mxu0 0.0
  %782 = vmatprep.subr.mxu0 0.0
  %783 = vmatpush1.msra.mxu0 0.0
  %784 = vmatprep.subr.mxu0 0.0
  %785 = vmatpush1.msra.mxu0 0.0
  %786 = vmatprep.subr.mxu0 0.0
  %787 = vmatpush1.msra.mxu0 0.0
  %788 = vmatprep.subr.mxu0 0.0
  %789 = vmatpush1.msra.mxu0 0.0
  %790 = vmatprep.subr.mxu0 0.0
  %791 = vmatpush1.msra.mxu0 0.0
  %792 = vmatprep.subr.mxu0 0.0
  %793 = vmatpush1.msra.mxu0 0.0
  %794 = vmatprep.subr.mxu0 0.0
  %795 = vmatpush1.msra.mxu0 0.0
  %796 = vmatprep.subr.mxu0 0.0
  %797 = vmatpush1.msra.mxu0 0.0
  %798 = vmatprep.subr.mxu0 0.0
  %799 = vmatpush1.msra.mxu0 0.0
  %800 = vmatprep.subr.mxu0 0.0
  %801 = vmatpush1.msra.mxu0 0.0
  %802 = vmatprep.subr.mxu0 0.0
  %803 = vmatpush1.msra.mxu0 0.0
  %804 = vmatprep.subr.mxu0 0.0
  %805 = vmatpush1.msra.mxu0 0.0
  %806 = vmatprep.subr.mxu0 0.0
  %807 = vmatpush1.msra.mxu0 0.0
  %808 = vmatprep.subr.mxu0 0.0
  %809 = vmatpush1.msra.mxu0 0.0
  %810 = vmatprep.subr.mxu0 0.0
  %811 = vmatpush1.msra.mxu0 0.0
  %812 = vmatprep.mubr.f32.mxu0 0.0
  %813 = vmatmul.mubr.f32.gmra.mrb[0].mxu0 %v737
  %v814 = vpop.f32.mrb[0].mxu0
  %v815 = vadd.f32 0.0, %v814
  %v816 = vpop.f32.mrb[0].mxu0
  %817 = vmatprep.mubr.f32.mxu0 0.0
  %818 = vmatmul.mubr.f32.gmra.mrb[0].mxu0 %v740
  %v819 = vpop.f32.mrb[0].mxu0
  %v820 = vadd.f32 0.0, %v819
  %v821 = vpop.f32.mrb[0].mxu0
  %822 = vmatprep.mubr.f32.mxu0 0.0
  %823 = vmatmul.mubr.f32.gmra.mrb[0].mxu0 %v743
  %v824 = vpop.f32.mrb[0].mxu0
  %v825 = vadd.f32 0.0, %v824
  %v826 = vpop.f32.mrb[0].mxu0
  %827 = vmatprep.mubr.f32.mxu0 0.0
  %828 = vmatmul.mubr.f32.gmra.mrb[0].mxu0 %v746
  %v829 = vpop.f32.mrb[0].mxu0
  %v830 = vadd.f32 0.0, %v829
  %v831 = vpop.f32.mrb[0].mxu0
  %832 = vdwg.mxu0
  %v834 = vsel %vm707, %v815, 0
  %v837 = vsel %vm707, %v820, 0
  %v840 = vsel %vm707, %v825, 0
  %v843 = vsel %vm707, %v830, 0
  %845 = vmatprep.subr.mxu0 0.0
  %846 = vmatpush1.msra.mxu0 %v735
  %847 = vmatprep.subr.mxu0 0.0
  %848 = vmatpush1.msra.mxu0 0.0
  %849 = vmatprep.subr.mxu0 0.0
  %850 = vmatpush1.msra.mxu0 0.0
  %851 = vmatprep.subr.mxu0 0.0
  %852 = vmatpush1.msra.mxu0 0.0
  %853 = vmatprep.subr.mxu0 0.0
  %854 = vmatpush1.msra.mxu0 0.0
  %855 = vmatprep.subr.mxu0 0.0
  %856 = vmatpush1.msra.mxu0 0.0
  %857 = vmatprep.subr.mxu0 0.0
  %858 = vmatpush1.msra.mxu0 0.0
  %859 = vmatprep.subr.mxu0 0.0
  %860 = vmatpush1.msra.mxu0 0.0
  %861 = vmatprep.subr.mxu0 0.0
  %862 = vmatpush1.msra.mxu0 0.0
  %863 = vmatprep.subr.mxu0 0.0
  %864 = vmatpush1.msra.mxu0 0.0
  %865 = vmatprep.subr.mxu0 0.0
  %866 = vmatpush1.msra.mxu0 0.0
  %867 = vmatprep.subr.mxu0 0.0
  %868 = vmatpush1.msra.mxu0 0.0
  %869 = vmatprep.subr.mxu0 0.0
  %870 = vmatpush1.msra.mxu0 0.0
  %871 = vmatprep.subr.mxu0 0.0
  %872 = vmatpush1.msra.mxu0 0.0
  %873 = vmatprep.subr.mxu0 0.0
  %874 = vmatpush1.msra.mxu0 0.0
  %875 = vmatprep.subr.mxu0 0.0
  %876 = vmatpush1.msra.mxu0 0.0
  %877 = vmatprep.subr.mxu0 0.0
  %878 = vmatpush1.msra.mxu0 0.0
  %879 = vmatprep.subr.mxu0 0.0
  %880 = vmatpush1.msra.mxu0 0.0
  %881 = vmatprep.subr.mxu0 0.0
  %882 = vmatpush1.msra.mxu0 0.0
  %883 = vmatprep.subr.mxu0 0.0
  %884 = vmatpush1.msra.mxu0 0.0
  %885 = vmatprep.subr.mxu0 0.0
  %886 = vmatpush1.msra.mxu0 0.0
  %887 = vmatprep.subr.mxu0 0.0
  %888 = vmatpush1.msra.mxu0 0.0
  %889 = vmatprep.subr.mxu0 0.0
  %890 = vmatpush1.msra.mxu0 0.0
  %891 = vmatprep.subr.mxu0 0.0
  %892 = vmatpush1.msra.mxu0 0.0
  %893 = vmatprep.subr.mxu0 0.0
  %894 = vmatpush1.msra.mxu0 0.0
  %895 = vmatprep.subr.mxu0 0.0
  %896 = vmatpush1.msra.mxu0 0.0
  %897 = vmatprep.subr.mxu0 0.0
  %898 = vmatpush1.msra.mxu0 0.0
  %899 = vmatprep.subr.mxu0 0.0
  %900 = vmatpush1.msra.mxu0 0.0
  %901 = vmatprep.subr.mxu0 0.0
  %902 = vmatpush1.msra.mxu0 0.0
  %903 = vmatprep.subr.mxu0 0.0
  %904 = vmatpush1.msra.mxu0 0.0
  %905 = vmatprep.subr.mxu0 0.0
  %906 = vmatpush1.msra.mxu0 0.0
  %907 = vmatprep.subr.mxu0 0.0
  %908 = vmatpush1.msra.mxu0 0.0
  %909 = vmatprep.mubr.f32.mxu0 0.0
  %910 = vmatmul.mubr.f32.gmra.mrb[0].mxu0 %v834
  %v911 = vpop.f32.mrb[0].mxu0
  %v912 = vadd.f32 0.0, %v911
  %v913 = vpop.f32.mrb[0].mxu0
  %914 = vmatprep.mubr.f32.mxu0 0.0
  %915 = vmatmul.mubr.f32.gmra.mrb[0].mxu0 %v837
  %v916 = vpop.f32.mrb[0].mxu0
  %v917 = vadd.f32 0.0, %v916
  %v918 = vpop.f32.mrb[0].mxu0
  %919 = vmatprep.mubr.f32.mxu0 0.0
  %920 = vmatmul.mubr.f32.gmra.mrb[0].mxu0 %v840
  %v921 = vpop.f32.mrb[0].mxu0
  %v922 = vadd.f32 0.0, %v921
  %v923 = vpop.f32.mrb[0].mxu0
  %924 = vmatprep.mubr.f32.mxu0 0.0
  %925 = vmatmul.mubr.f32.gmra.mrb[0].mxu0 %v843
  %v926 = vpop.f32.mrb[0].mxu0
  %v927 = vadd.f32 0.0, %v926
  %v928 = vpop.f32.mrb[0].mxu0
  %929 = vdwg.mxu0
  %v931 = vsel %vm707, %v734, 0
  %933 = vmatprep.subr.mxu0 0.0
  %934 = vmatpush1.xpose.msra.mxu0 %v834
  %935 = vmatprep.subr.mxu0 0.0
  %936 = vmatpush1.xpose.msra.mxu0 %v837
  %937 = vmatprep.subr.mxu0 0.0
  %938 = vmatpush1.xpose.msra.mxu0 %v840
  %939 = vmatprep.subr.mxu0 0.0
  %940 = vmatpush1.xpose.msra.mxu0 %v843
  %941 = vmatprep.subr.mxu0 0.0
  %942 = vmatpush1.xpose.msra.mxu0 0.0
  %943 = vmatprep.subr.mxu0 0.0
  %944 = vmatpush1.xpose.msra.mxu0 0.0
  %945 = vmatprep.subr.mxu0 0.0
  %946 = vmatpush1.xpose.msra.mxu0 0.0
  %947 = vmatprep.subr.mxu0 0.0
  %948 = vmatpush1.xpose.msra.mxu0 0.0
  %949 = vmatprep.subr.mxu0 0.0
  %950 = vmatpush1.xpose.msra.mxu0 0.0
  %951 = vmatprep.subr.mxu0 0.0
  %952 = vmatpush1.xpose.msra.mxu0 0.0
  %953 = vmatprep.subr.mxu0 0.0
  %954 = vmatpush1.xpose.msra.mxu0 0.0
  %955 = vmatprep.subr.mxu0 0.0
  %956 = vmatpush1.xpose.msra.mxu0 0.0
  %957 = vmatprep.subr.mxu0 0.0
  %958 = vmatpush1.xpose.msra.mxu0 0.0
  %959 = vmatprep.subr.mxu0 0.0
  %960 = vmatpush1.xpose.msra.mxu0 0.0
  %961 = vmatprep.subr.mxu0 0.0
  %962 = vmatpush1.xpose.msra.mxu0 0.0
  %963 = vmatprep.subr.mxu0 0.0
  %964 = vmatpush1.xpose.msra.mxu0 0.0
  %965 = vmatprep.subr.mxu0 0.0
  %966 = vmatpush1.xpose.msra.mxu0 0.0
  %967 = vmatprep.subr.mxu0 0.0
  %968 = vmatpush1.xpose.msra.mxu0 0.0
  %969 = vmatprep.subr.mxu0 0.0
  %970 = vmatpush1.xpose.msra.mxu0 0.0
  %971 = vmatprep.subr.mxu0 0.0
  %972 = vmatpush1.xpose.msra.mxu0 0.0
  %973 = vmatprep.subr.mxu0 0.0
  %974 = vmatpush1.xpose.msra.mxu0 0.0
  %975 = vmatprep.subr.mxu0 0.0
  %976 = vmatpush1.xpose.msra.mxu0 0.0
  %977 = vmatprep.subr.mxu0 0.0
  %978 = vmatpush1.xpose.msra.mxu0 0.0
  %979 = vmatprep.subr.mxu0 0.0
  %980 = vmatpush1.xpose.msra.mxu0 0.0
  %981 = vmatprep.subr.mxu0 0.0
  %982 = vmatpush1.xpose.msra.mxu0 0.0
  %983 = vmatprep.subr.mxu0 0.0
  %984 = vmatpush1.xpose.msra.mxu0 0.0
  %985 = vmatprep.subr.mxu0 0.0
  %986 = vmatpush1.xpose.msra.mxu0 0.0
  %987 = vmatprep.subr.mxu0 0.0
  %988 = vmatpush1.xpose.msra.mxu0 0.0
  %989 = vmatprep.subr.mxu0 0.0
  %990 = vmatpush1.xpose.msra.mxu0 0.0
  %991 = vmatprep.subr.mxu0 0.0
  %992 = vmatpush1.xpose.msra.mxu0 0.0
  %993 = vmatprep.subr.mxu0 0.0
  %994 = vmatpush1.xpose.msra.mxu0 0.0
  %995 = vmatprep.subr.mxu0 0.0
  %996 = vmatpush1.xpose.msra.mxu0 0.0
  %997 = vmatprep.mubr.f32.mxu0 0.0
  %998 = vmatmul.mubr.f32.gmra.mrb[0].mxu0 %v931
  %v999 = vpop.f32.mrb[0].mxu0
  %v1000 = vadd.f32 0.0, %v999
  %v1001 = vpop.f32.mrb[0].mxu0
  %1002 = vdwg.mxu0
  %1004 = vset.pattern.permute.xlu0 0
  %1005 = vperm.xlu0 %1004, %v912
  %v1006 = vpop.permute.xlu0 %1005
  %1009 = vset.pattern.permute.xlu0 0
  %1010 = vperm.xlu0 %1009, %v917
  %v1011 = vpop.permute.xlu0 %1010
  %1014 = vset.pattern.permute.xlu0 0
  %1015 = vperm.xlu0 %1014, %v922
  %v1016 = vpop.permute.xlu0 %1015
  %1019 = vset.pattern.permute.xlu0 0
  %1020 = vperm.xlu0 %1019, %v927
  %v1021 = vpop.permute.xlu0 %1020
  %v1023 = vlaneseq
  %v1024 = vshrl.u32 %v1023, 7
  %v1025 = vsub.s32 0, %v1024
  %v1026 = vrot.slane %v1000, %v1025
  %v1027 = vadd.f32 %v1006, %v1026
  %v1028 = vadd.f32 %v1011, %v1026
  %v1029 = vadd.f32 %v1016, %v1026
  %v1030 = vadd.f32 %v1021, %v1026
  %vm1031 = vcmp.ge.f32.partialorder %v1027, 0.0
  %vm1032 = vcmp.ge.f32.partialorder %v1028, 0.0
  %vm1033 = vcmp.ge.f32.partialorder %v1029, 0.0
  %vm1034 = vcmp.ge.f32.partialorder %v1030, 0.0
  %v1035 = vmul.f32 %v1027, 0.2
  %v1036 = vmul.f32 %v1028, 0.2
  %v1037 = vmul.f32 %v1029, 0.2
  %v1038 = vmul.f32 %v1030, 0.2
  %v1039 = vsel %vm1031, %v1027, %v1035
  %v1040 = vsel %vm1032, %v1028, %v1036
  %v1041 = vsel %vm1033, %v1029, %v1037
  %v1042 = vsel %vm1034, %v1030, %v1038
  %v1043 = vsel %vm23, %v1039, -1e+30
  %v1044 = vsel %vm24, %v1040, -1e+30
  %v1045 = vsel %vm25, %v1041, -1e+30
  %v1046 = vsel %vm26, %v1042, -1e+30
  %v1047 = vsel %vm348, %v1043, -inf
  %1048 = vmax.xlane.f32.xlu0 %v1047
  %v1049 = vpop.xlane.xlu0 %1048
  %v1050 = vsel %vm348, %v1044, -inf
  %1051 = vmax.xlane.f32.xlu0 %v1050
  %v1052 = vpop.xlane.xlu0 %1051
  %v1053 = vsel %vm348, %v1045, -inf
  %1054 = vmax.xlane.f32.xlu0 %v1053
  %v1055 = vpop.xlane.xlu0 %1054
  %v1056 = vsel %vm348, %v1046, -inf
  %1057 = vmax.xlane.f32.xlu0 %v1056
  %v1058 = vpop.xlane.xlu0 %1057
  %v1059 = vsub.f32 %v1043, %v1049
  %v1060 = vsub.f32 %v1044, %v1052
  %v1061 = vsub.f32 %v1045, %v1055
  %v1062 = vsub.f32 %v1046, %v1058
  %v1063 = vmul.f32 %v1059, 1.442695
  %v1064 = vpow.pop %v1063
  %v1065 = vmul.f32 %v1060, 1.442695
  %v1066 = vpow.pop %v1065
  %v1067 = vmul.f32 %v1061, 1.442695
  %v1068 = vpow.pop %v1067
  %v1069 = vmul.f32 %v1062, 1.442695
  %v1070 = vpow.pop %v1069
  %v1071 = vsel %vm348, %v1064, 0.0
  %1072 = vadd.xlane.f32.xlu0 %v1071
  %v1073 = vpop.xlane.xlu0 %1072
  %v1074 = vsel %vm348, %v1066, 0.0
  %1075 = vadd.xlane.f32.xlu0 %v1074
  %v1076 = vpop.xlane.xlu0 %1075
  %v1077 = vsel %vm348, %v1068, 0.0
  %1078 = vadd.xlane.f32.xlu0 %v1077
  %v1079 = vpop.xlane.xlu0 %1078
  %v1080 = vsel %vm348, %v1070, 0.0
  %1081 = vadd.xlane.f32.xlu0 %v1080
  %v1082 = vpop.xlane.xlu0 %1081
  %v1083 = vmax.f32 %v1073, 1e-30
  %v1084 = vmax.f32 %v1076, 1e-30
  %v1085 = vmax.f32 %v1079, 1e-30
  %v1086 = vmax.f32 %v1082, 1e-30
  %v1087 = vrcp.pop %v1083
  %v1088 = vrcp.pop %v1084
  %v1089 = vrcp.pop %v1085
  %v1090 = vrcp.pop %v1086
  %v1091 = vmul.f32 %v1064, %v1087
  %v1092 = vmul.f32 %v1066, %v1088
  %v1093 = vmul.f32 %v1068, %v1089
  %v1094 = vmul.f32 %v1070, %v1090
  %v1096 = vsel %vm348, %v1091, 0
  %v1099 = vsel %vm348, %v1092, 0
  %v1102 = vsel %vm348, %v1093, 0
  %v1105 = vsel %vm348, %v1094, 0
  %1107 = vmatprep.subr.mxu0 0.0
  %1108 = vmatpush1.msra.mxu0 %v815
  %1109 = vmatprep.subr.mxu0 0.0
  %1110 = vmatpush1.msra.mxu0 %v820
  %1111 = vmatprep.subr.mxu0 0.0
  %1112 = vmatpush1.msra.mxu0 %v825
  %1113 = vmatprep.subr.mxu0 0.0
  %1114 = vmatpush1.msra.mxu0 %v830
  %1115 = vmatprep.subr.mxu0 0.0
  %1116 = vmatpush1.msra.mxu0 0.0
  %1117 = vmatprep.subr.mxu0 0.0
  %1118 = vmatpush1.msra.mxu0 0.0
  %1119 = vmatprep.subr.mxu0 0.0
  %1120 = vmatpush1.msra.mxu0 0.0
  %1121 = vmatprep.subr.mxu0 0.0
  %1122 = vmatpush1.msra.mxu0 0.0
  %1123 = vmatprep.subr.mxu0 0.0
  %1124 = vmatpush1.msra.mxu0 0.0
  %1125 = vmatprep.subr.mxu0 0.0
  %1126 = vmatpush1.msra.mxu0 0.0
  %1127 = vmatprep.subr.mxu0 0.0
  %1128 = vmatpush1.msra.mxu0 0.0
  %1129 = vmatprep.subr.mxu0 0.0
  %1130 = vmatpush1.msra.mxu0 0.0
  %1131 = vmatprep.subr.mxu0 0.0
  %1132 = vmatpush1.msra.mxu0 0.0
  %1133 = vmatprep.subr.mxu0 0.0
  %1134 = vmatpush1.msra.mxu0 0.0
  %1135 = vmatprep.subr.mxu0 0.0
  %1136 = vmatpush1.msra.mxu0 0.0
  %1137 = vmatprep.subr.mxu0 0.0
  %1138 = vmatpush1.msra.mxu0 0.0
  %1139 = vmatprep.subr.mxu0 0.0
  %1140 = vmatpush1.msra.mxu0 0.0
  %1141 = vmatprep.subr.mxu0 0.0
  %1142 = vmatpush1.msra.mxu0 0.0
  %1143 = vmatprep.subr.mxu0 0.0
  %1144 = vmatpush1.msra.mxu0 0.0
  %1145 = vmatprep.subr.mxu0 0.0
  %1146 = vmatpush1.msra.mxu0 0.0
  %1147 = vmatprep.subr.mxu0 0.0
  %1148 = vmatpush1.msra.mxu0 0.0
  %1149 = vmatprep.subr.mxu0 0.0
  %1150 = vmatpush1.msra.mxu0 0.0
  %1151 = vmatprep.subr.mxu0 0.0
  %1152 = vmatpush1.msra.mxu0 0.0
  %1153 = vmatprep.subr.mxu0 0.0
  %1154 = vmatpush1.msra.mxu0 0.0
  %1155 = vmatprep.subr.mxu0 0.0
  %1156 = vmatpush1.msra.mxu0 0.0
  %1157 = vmatprep.subr.mxu0 0.0
  %1158 = vmatpush1.msra.mxu0 0.0
  %1159 = vmatprep.subr.mxu0 0.0
  %1160 = vmatpush1.msra.mxu0 0.0
  %1161 = vmatprep.subr.mxu0 0.0
  %1162 = vmatpush1.msra.mxu0 0.0
  %1163 = vmatprep.subr.mxu0 0.0
  %1164 = vmatpush1.msra.mxu0 0.0
  %1165 = vmatprep.subr.mxu0 0.0
  %1166 = vmatpush1.msra.mxu0 0.0
  %1167 = vmatprep.subr.mxu0 0.0
  %1168 = vmatpush1.msra.mxu0 0.0
  %1169 = vmatprep.subr.mxu0 0.0
  %1170 = vmatpush1.msra.mxu0 0.0
  %1171 = vmatprep.mubr.f32.mxu0 0.0
  %1172 = vmatmul.mubr.f32.gmra.mrb[0].mxu0 %v1096
  %v1173 = vpop.f32.mrb[0].mxu0
  %v1174 = vadd.f32 0.0, %v1173
  %v1175 = vpop.f32.mrb[0].mxu0
  %1176 = vmatprep.mubr.f32.mxu0 0.0
  %1177 = vmatmul.mubr.f32.gmra.mrb[0].mxu0 %v1099
  %v1178 = vpop.f32.mrb[0].mxu0
  %v1179 = vadd.f32 0.0, %v1178
  %v1180 = vpop.f32.mrb[0].mxu0
  %1181 = vmatprep.mubr.f32.mxu0 0.0
  %1182 = vmatmul.mubr.f32.gmra.mrb[0].mxu0 %v1102
  %v1183 = vpop.f32.mrb[0].mxu0
  %v1184 = vadd.f32 0.0, %v1183
  %v1185 = vpop.f32.mrb[0].mxu0
  %1186 = vmatprep.mubr.f32.mxu0 0.0
  %1187 = vmatmul.mubr.f32.gmra.mrb[0].mxu0 %v1105
  %v1188 = vpop.f32.mrb[0].mxu0
  %v1189 = vadd.f32 0.0, %v1188
  %v1190 = vpop.f32.mrb[0].mxu0
  %1191 = vdwg.mxu0
  %1192 = vset.pattern.permute.xlu0 1
  %1193 = vperm.xlu0 %1192, %v912
  %v1194 = vpop.permute.xlu0 %1193
  %1196 = vset.pattern.permute.xlu0 1
  %1197 = vperm.xlu0 %1196, %v917
  %v1198 = vpop.permute.xlu0 %1197
  %1200 = vset.pattern.permute.xlu0 1
  %1201 = vperm.xlu0 %1200, %v922
  %v1202 = vpop.permute.xlu0 %1201
  %1204 = vset.pattern.permute.xlu0 1
  %1205 = vperm.xlu0 %1204, %v927
  %v1206 = vpop.permute.xlu0 %1205
  %v1208 = vlaneseq
  %v1209 = vshrl.u32 %v1208, 7
  %v1210 = vsub.s32 1, %v1209
  %v1211 = vrot.slane %v1000, %v1210
  %v1212 = vadd.f32 %v1194, %v1211
  %v1213 = vadd.f32 %v1198, %v1211
  %v1214 = vadd.f32 %v1202, %v1211
  %v1215 = vadd.f32 %v1206, %v1211
  %vm1216 = vcmp.ge.f32.partialorder %v1212, 0.0
  %vm1217 = vcmp.ge.f32.partialorder %v1213, 0.0
  %vm1218 = vcmp.ge.f32.partialorder %v1214, 0.0
  %vm1219 = vcmp.ge.f32.partialorder %v1215, 0.0
  %v1220 = vmul.f32 %v1212, 0.2
  %v1221 = vmul.f32 %v1213, 0.2
  %v1222 = vmul.f32 %v1214, 0.2
  %v1223 = vmul.f32 %v1215, 0.2
  %v1224 = vsel %vm1216, %v1212, %v1220
  %v1225 = vsel %vm1217, %v1213, %v1221
  %v1226 = vsel %vm1218, %v1214, %v1222
  %v1227 = vsel %vm1219, %v1215, %v1223
  %v1228 = vsel %vm23, %v1224, -1e+30
  %v1229 = vsel %vm24, %v1225, -1e+30
  %v1230 = vsel %vm25, %v1226, -1e+30
  %v1231 = vsel %vm26, %v1227, -1e+30
  %v1232 = vsel %vm348, %v1228, -inf
  %1233 = vmax.xlane.f32.xlu0 %v1232
  %v1234 = vpop.xlane.xlu0 %1233
  %v1235 = vsel %vm348, %v1229, -inf
  %1236 = vmax.xlane.f32.xlu0 %v1235
  %v1237 = vpop.xlane.xlu0 %1236
  %v1238 = vsel %vm348, %v1230, -inf
  %1239 = vmax.xlane.f32.xlu0 %v1238
  %v1240 = vpop.xlane.xlu0 %1239
  %v1241 = vsel %vm348, %v1231, -inf
  %1242 = vmax.xlane.f32.xlu0 %v1241
  %v1243 = vpop.xlane.xlu0 %1242
  %v1244 = vsub.f32 %v1228, %v1234
  %v1245 = vsub.f32 %v1229, %v1237
  %v1246 = vsub.f32 %v1230, %v1240
  %v1247 = vsub.f32 %v1231, %v1243
  %v1248 = vmul.f32 %v1244, 1.442695
  %v1249 = vpow.pop %v1248
  %v1250 = vmul.f32 %v1245, 1.442695
  %v1251 = vpow.pop %v1250
  %v1252 = vmul.f32 %v1246, 1.442695
  %v1253 = vpow.pop %v1252
  %v1254 = vmul.f32 %v1247, 1.442695
  %v1255 = vpow.pop %v1254
  %v1256 = vsel %vm348, %v1249, 0.0
  %1257 = vadd.xlane.f32.xlu0 %v1256
  %v1258 = vpop.xlane.xlu0 %1257
  %v1259 = vsel %vm348, %v1251, 0.0
  %1260 = vadd.xlane.f32.xlu0 %v1259
  %v1261 = vpop.xlane.xlu0 %1260
  %v1262 = vsel %vm348, %v1253, 0.0
  %1263 = vadd.xlane.f32.xlu0 %v1262
  %v1264 = vpop.xlane.xlu0 %1263
  %v1265 = vsel %vm348, %v1255, 0.0
  %1266 = vadd.xlane.f32.xlu0 %v1265
  %v1267 = vpop.xlane.xlu0 %1266
  %v1268 = vmax.f32 %v1258, 1e-30
  %v1269 = vmax.f32 %v1261, 1e-30
  %v1270 = vmax.f32 %v1264, 1e-30
  %v1271 = vmax.f32 %v1267, 1e-30
  %v1272 = vrcp.pop %v1268
  %v1273 = vrcp.pop %v1269
  %v1274 = vrcp.pop %v1270
  %v1275 = vrcp.pop %v1271
  %v1276 = vmul.f32 %v1249, %v1272
  %v1277 = vmul.f32 %v1251, %v1273
  %v1278 = vmul.f32 %v1253, %v1274
  %v1279 = vmul.f32 %v1255, %v1275
  %1280 = vrot.lane.b32.xlu0 %v815, 124
  %v1281 = vpop.permute.xlu0 %1280
  %1282 = vrot.lane.b32.xlu0 %v820, 124
  %v1283 = vpop.permute.xlu0 %1282
  %1284 = vrot.lane.b32.xlu0 %v825, 124
  %v1285 = vpop.permute.xlu0 %1284
  %1286 = vrot.lane.b32.xlu0 %v830, 124
  %v1287 = vpop.permute.xlu0 %1286
  %v1293 = vsel %vm348, %v1276, 0
  %v1296 = vsel %vm348, %v1277, 0
  %v1299 = vsel %vm348, %v1278, 0
  %v1302 = vsel %vm348, %v1279, 0
  %1304 = vmatprep.subr.mxu0 0.0
  %1305 = vmatpush1.msra.mxu0 %v1281
  %1306 = vmatprep.subr.mxu0 0.0
  %1307 = vmatpush1.msra.mxu0 %v1283
  %1308 = vmatprep.subr.mxu0 0.0
  %1309 = vmatpush1.msra.mxu0 %v1285
  %1310 = vmatprep.subr.mxu0 0.0
  %1311 = vmatpush1.msra.mxu0 %v1287
  %1312 = vmatprep.subr.mxu0 0.0
  %1313 = vmatpush1.msra.mxu0 0.0
  %1314 = vmatprep.subr.mxu0 0.0
  %1315 = vmatpush1.msra.mxu0 0.0
  %1316 = vmatprep.subr.mxu0 0.0
  %1317 = vmatpush1.msra.mxu0 0.0
  %1318 = vmatprep.subr.mxu0 0.0
  %1319 = vmatpush1.msra.mxu0 0.0
  %1320 = vmatprep.subr.mxu0 0.0
  %1321 = vmatpush1.msra.mxu0 0.0
  %1322 = vmatprep.subr.mxu0 0.0
  %1323 = vmatpush1.msra.mxu0 0.0
  %1324 = vmatprep.subr.mxu0 0.0
  %1325 = vmatpush1.msra.mxu0 0.0
  %1326 = vmatprep.subr.mxu0 0.0
  %1327 = vmatpush1.msra.mxu0 0.0
  %1328 = vmatprep.subr.mxu0 0.0
  %1329 = vmatpush1.msra.mxu0 0.0
  %1330 = vmatprep.subr.mxu0 0.0
  %1331 = vmatpush1.msra.mxu0 0.0
  %1332 = vmatprep.subr.mxu0 0.0
  %1333 = vmatpush1.msra.mxu0 0.0
  %1334 = vmatprep.subr.mxu0 0.0
  %1335 = vmatpush1.msra.mxu0 0.0
  %1336 = vmatprep.subr.mxu0 0.0
  %1337 = vmatpush1.msra.mxu0 0.0
  %1338 = vmatprep.subr.mxu0 0.0
  %1339 = vmatpush1.msra.mxu0 0.0
  %1340 = vmatprep.subr.mxu0 0.0
  %1341 = vmatpush1.msra.mxu0 0.0
  %1342 = vmatprep.subr.mxu0 0.0
  %1343 = vmatpush1.msra.mxu0 0.0
  %1344 = vmatprep.subr.mxu0 0.0
  %1345 = vmatpush1.msra.mxu0 0.0
  %1346 = vmatprep.subr.mxu0 0.0
  %1347 = vmatpush1.msra.mxu0 0.0
  %1348 = vmatprep.subr.mxu0 0.0
  %1349 = vmatpush1.msra.mxu0 0.0
  %1350 = vmatprep.subr.mxu0 0.0
  %1351 = vmatpush1.msra.mxu0 0.0
  %1352 = vmatprep.subr.mxu0 0.0
  %1353 = vmatpush1.msra.mxu0 0.0
  %1354 = vmatprep.subr.mxu0 0.0
  %1355 = vmatpush1.msra.mxu0 0.0
  %1356 = vmatprep.subr.mxu0 0.0
  %1357 = vmatpush1.msra.mxu0 0.0
  %1358 = vmatprep.subr.mxu0 0.0
  %1359 = vmatpush1.msra.mxu0 0.0
  %1360 = vmatprep.subr.mxu0 0.0
  %1361 = vmatpush1.msra.mxu0 0.0
  %1362 = vmatprep.subr.mxu0 0.0
  %1363 = vmatpush1.msra.mxu0 0.0
  %1364 = vmatprep.subr.mxu0 0.0
  %1365 = vmatpush1.msra.mxu0 0.0
  %1366 = vmatprep.subr.mxu0 0.0
  %1367 = vmatpush1.msra.mxu0 0.0
  %1368 = vmatprep.mubr.f32.mxu0 0.0
  %1369 = vmatmul.mubr.f32.gmra.mrb[0].mxu0 %v1293
  %v1370 = vpop.f32.mrb[0].mxu0
  %v1371 = vadd.f32 0.0, %v1370
  %v1372 = vpop.f32.mrb[0].mxu0
  %1373 = vmatprep.mubr.f32.mxu0 0.0
  %1374 = vmatmul.mubr.f32.gmra.mrb[0].mxu0 %v1296
  %v1375 = vpop.f32.mrb[0].mxu0
  %v1376 = vadd.f32 0.0, %v1375
  %v1377 = vpop.f32.mrb[0].mxu0
  %1378 = vmatprep.mubr.f32.mxu0 0.0
  %1379 = vmatmul.mubr.f32.gmra.mrb[0].mxu0 %v1299
  %v1380 = vpop.f32.mrb[0].mxu0
  %v1381 = vadd.f32 0.0, %v1380
  %v1382 = vpop.f32.mrb[0].mxu0
  %1383 = vmatprep.mubr.f32.mxu0 0.0
  %1384 = vmatmul.mubr.f32.gmra.mrb[0].mxu0 %v1302
  %v1385 = vpop.f32.mrb[0].mxu0
  %v1386 = vadd.f32 0.0, %v1385
  %v1387 = vpop.f32.mrb[0].mxu0
  %1388 = vdwg.mxu0
  %1393 = vrot.lane.b32.xlu0 %v1371, 4
  %v1394 = vpop.permute.xlu0 %1393
  %1395 = vrot.lane.b32.xlu0 %v1376, 4
  %v1396 = vpop.permute.xlu0 %1395
  %1397 = vrot.lane.b32.xlu0 %v1381, 4
  %v1398 = vpop.permute.xlu0 %1397
  %1399 = vrot.lane.b32.xlu0 %v1386, 4
  %v1400 = vpop.permute.xlu0 %1399
  %vm1405 = vcmask 31744
  %v1406 = vsel %vm1405, %v1174, %v1394
  %v1407 = vsel %vm1405, %v1179, %v1396
  %v1408 = vsel %vm1405, %v1184, %v1398
  %v1409 = vsel %vm1405, %v1189, %v1400
  %vm1410 = vcmp.gt.f32.partialorder %v1406, 0.0
  %vm1411 = vcmp.gt.f32.partialorder %v1407, 0.0
  %vm1412 = vcmp.gt.f32.partialorder %v1408, 0.0
  %vm1413 = vcmp.gt.f32.partialorder %v1409, 0.0
  %v1414 = vmul.f32 %v1406, 1.442695
  %v1415 = vpow.pop %v1414
  %v1416 = vmul.f32 %v1407, 1.442695
  %v1417 = vpow.pop %v1416
  %v1418 = vmul.f32 %v1408, 1.442695
  %v1419 = vpow.pop %v1418
  %v1420 = vmul.f32 %v1409, 1.442695
  %v1421 = vpow.pop %v1420
  %v1422 = vsub.f32 %v1415, 1.0
  %v1423 = vsub.f32 %v1417, 1.0
  %v1424 = vsub.f32 %v1419, 1.0
  %v1425 = vsub.f32 %v1421, 1.0
  %v1426 = vsel %vm1410, %v1406, %v1422
  %v1427 = vsel %vm1411, %v1407, %v1423
  %v1428 = vsel %vm1412, %v1408, %v1424
  %v1429 = vsel %vm1413, %v1409, %v1425
  %v1430 = vld [vmem:[%s2 + $0x3c] sm:$0xff]
  %v1431 = vld [vmem:[%s2 + $0x44] sm:$0x1]
  %v1432 = vld [vmem:[%s2 + $0x45] sm:$0xf]
  %v1434 = vsel %vm707, %v1426, 0
  %v1437 = vsel %vm707, %v1427, 0
  %v1440 = vsel %vm707, %v1428, 0
  %v1443 = vsel %vm707, %v1429, 0
  %1445 = vmatprep.subr.mxu0 0.0
  %1446 = vmatpush1.msra.mxu0 %v1430
  %1447 = vmatprep.subr.mxu0 0.0
  %1448 = vmatpush1.msra.mxu0 0.0
  %1449 = vmatprep.subr.mxu0 0.0
  %1450 = vmatpush1.msra.mxu0 0.0
  %1451 = vmatprep.subr.mxu0 0.0
  %1452 = vmatpush1.msra.mxu0 0.0
  %1453 = vmatprep.subr.mxu0 0.0
  %1454 = vmatpush1.msra.mxu0 0.0
  %1455 = vmatprep.subr.mxu0 0.0
  %1456 = vmatpush1.msra.mxu0 0.0
  %1457 = vmatprep.subr.mxu0 0.0
  %1458 = vmatpush1.msra.mxu0 0.0
  %1459 = vmatprep.subr.mxu0 0.0
  %1460 = vmatpush1.msra.mxu0 0.0
  %1461 = vmatprep.subr.mxu0 0.0
  %1462 = vmatpush1.msra.mxu0 0.0
  %1463 = vmatprep.subr.mxu0 0.0
  %1464 = vmatpush1.msra.mxu0 0.0
  %1465 = vmatprep.subr.mxu0 0.0
  %1466 = vmatpush1.msra.mxu0 0.0
  %1467 = vmatprep.subr.mxu0 0.0
  %1468 = vmatpush1.msra.mxu0 0.0
  %1469 = vmatprep.subr.mxu0 0.0
  %1470 = vmatpush1.msra.mxu0 0.0
  %1471 = vmatprep.subr.mxu0 0.0
  %1472 = vmatpush1.msra.mxu0 0.0
  %1473 = vmatprep.subr.mxu0 0.0
  %1474 = vmatpush1.msra.mxu0 0.0
  %1475 = vmatprep.subr.mxu0 0.0
  %1476 = vmatpush1.msra.mxu0 0.0
  %1477 = vmatprep.subr.mxu0 0.0
  %1478 = vmatpush1.msra.mxu0 0.0
  %1479 = vmatprep.subr.mxu0 0.0
  %1480 = vmatpush1.msra.mxu0 0.0
  %1481 = vmatprep.subr.mxu0 0.0
  %1482 = vmatpush1.msra.mxu0 0.0
  %1483 = vmatprep.subr.mxu0 0.0
  %1484 = vmatpush1.msra.mxu0 0.0
  %1485 = vmatprep.subr.mxu0 0.0
  %1486 = vmatpush1.msra.mxu0 0.0
  %1487 = vmatprep.subr.mxu0 0.0
  %1488 = vmatpush1.msra.mxu0 0.0
  %1489 = vmatprep.subr.mxu0 0.0
  %1490 = vmatpush1.msra.mxu0 0.0
  %1491 = vmatprep.subr.mxu0 0.0
  %1492 = vmatpush1.msra.mxu0 0.0
  %1493 = vmatprep.subr.mxu0 0.0
  %1494 = vmatpush1.msra.mxu0 0.0
  %1495 = vmatprep.subr.mxu0 0.0
  %1496 = vmatpush1.msra.mxu0 0.0
  %1497 = vmatprep.subr.mxu0 0.0
  %1498 = vmatpush1.msra.mxu0 0.0
  %1499 = vmatprep.subr.mxu0 0.0
  %1500 = vmatpush1.msra.mxu0 0.0
  %1501 = vmatprep.subr.mxu0 0.0
  %1502 = vmatpush1.msra.mxu0 0.0
  %1503 = vmatprep.subr.mxu0 0.0
  %1504 = vmatpush1.msra.mxu0 0.0
  %1505 = vmatprep.subr.mxu0 0.0
  %1506 = vmatpush1.msra.mxu0 0.0
  %1507 = vmatprep.subr.mxu0 0.0
  %1508 = vmatpush1.msra.mxu0 0.0
  %1509 = vmatprep.mubr.f32.mxu0 0.0
  %1510 = vmatmul.mubr.f32.gmra.mrb[0].mxu0 %v1434
  %v1511 = vpop.f32.mrb[0].mxu0
  %v1512 = vadd.f32 0.0, %v1511
  %v1513 = vpop.f32.mrb[0].mxu0
  %1514 = vmatprep.mubr.f32.mxu0 0.0
  %1515 = vmatmul.mubr.f32.gmra.mrb[0].mxu0 %v1437
  %v1516 = vpop.f32.mrb[0].mxu0
  %v1517 = vadd.f32 0.0, %v1516
  %v1518 = vpop.f32.mrb[0].mxu0
  %1519 = vmatprep.mubr.f32.mxu0 0.0
  %1520 = vmatmul.mubr.f32.gmra.mrb[0].mxu0 %v1440
  %v1521 = vpop.f32.mrb[0].mxu0
  %v1522 = vadd.f32 0.0, %v1521
  %v1523 = vpop.f32.mrb[0].mxu0
  %1524 = vmatprep.mubr.f32.mxu0 0.0
  %1525 = vmatmul.mubr.f32.gmra.mrb[0].mxu0 %v1443
  %v1526 = vpop.f32.mrb[0].mxu0
  %v1527 = vadd.f32 0.0, %v1526
  %v1528 = vpop.f32.mrb[0].mxu0
  %1529 = vdwg.mxu0
  %v1531 = vsel %vm1405, %v1512, 0
  %v1534 = vsel %vm1405, %v1517, 0
  %v1537 = vsel %vm1405, %v1522, 0
  %v1540 = vsel %vm1405, %v1527, 0
  %vm1542 = vcmask 1043456
  %v1544 = vsel %vm1542, %v1432, 0
  %1546 = vmatprep.subr.mxu0 0.0
  %1547 = vmatpush1.msra.mxu0 %v1544
  %1548 = vmatprep.subr.mxu0 0.0
  %1549 = vmatpush1.msra.mxu0 0.0
  %1550 = vmatprep.subr.mxu0 0.0
  %1551 = vmatpush1.msra.mxu0 0.0
  %1552 = vmatprep.subr.mxu0 0.0
  %1553 = vmatpush1.msra.mxu0 0.0
  %1554 = vmatprep.subr.mxu0 0.0
  %1555 = vmatpush1.msra.mxu0 0.0
  %1556 = vmatprep.subr.mxu0 0.0
  %1557 = vmatpush1.msra.mxu0 0.0
  %1558 = vmatprep.subr.mxu0 0.0
  %1559 = vmatpush1.msra.mxu0 0.0
  %1560 = vmatprep.subr.mxu0 0.0
  %1561 = vmatpush1.msra.mxu0 0.0
  %1562 = vmatprep.subr.mxu0 0.0
  %1563 = vmatpush1.msra.mxu0 0.0
  %1564 = vmatprep.subr.mxu0 0.0
  %1565 = vmatpush1.msra.mxu0 0.0
  %1566 = vmatprep.subr.mxu0 0.0
  %1567 = vmatpush1.msra.mxu0 0.0
  %1568 = vmatprep.subr.mxu0 0.0
  %1569 = vmatpush1.msra.mxu0 0.0
  %1570 = vmatprep.subr.mxu0 0.0
  %1571 = vmatpush1.msra.mxu0 0.0
  %1572 = vmatprep.subr.mxu0 0.0
  %1573 = vmatpush1.msra.mxu0 0.0
  %1574 = vmatprep.subr.mxu0 0.0
  %1575 = vmatpush1.msra.mxu0 0.0
  %1576 = vmatprep.subr.mxu0 0.0
  %1577 = vmatpush1.msra.mxu0 0.0
  %1578 = vmatprep.subr.mxu0 0.0
  %1579 = vmatpush1.msra.mxu0 0.0
  %1580 = vmatprep.subr.mxu0 0.0
  %1581 = vmatpush1.msra.mxu0 0.0
  %1582 = vmatprep.subr.mxu0 0.0
  %1583 = vmatpush1.msra.mxu0 0.0
  %1584 = vmatprep.subr.mxu0 0.0
  %1585 = vmatpush1.msra.mxu0 0.0
  %1586 = vmatprep.subr.mxu0 0.0
  %1587 = vmatpush1.msra.mxu0 0.0
  %1588 = vmatprep.subr.mxu0 0.0
  %1589 = vmatpush1.msra.mxu0 0.0
  %1590 = vmatprep.subr.mxu0 0.0
  %1591 = vmatpush1.msra.mxu0 0.0
  %1592 = vmatprep.subr.mxu0 0.0
  %1593 = vmatpush1.msra.mxu0 0.0
  %1594 = vmatprep.subr.mxu0 0.0
  %1595 = vmatpush1.msra.mxu0 0.0
  %1596 = vmatprep.subr.mxu0 0.0
  %1597 = vmatpush1.msra.mxu0 0.0
  %1598 = vmatprep.subr.mxu0 0.0
  %1599 = vmatpush1.msra.mxu0 0.0
  %1600 = vmatprep.subr.mxu0 0.0
  %1601 = vmatpush1.msra.mxu0 0.0
  %1602 = vmatprep.subr.mxu0 0.0
  %1603 = vmatpush1.msra.mxu0 0.0
  %1604 = vmatprep.subr.mxu0 0.0
  %1605 = vmatpush1.msra.mxu0 0.0
  %1606 = vmatprep.subr.mxu0 0.0
  %1607 = vmatpush1.msra.mxu0 0.0
  %1608 = vmatprep.subr.mxu0 0.0
  %1609 = vmatpush1.msra.mxu0 0.0
  %1610 = vmatprep.mubr.f32.mxu0 0.0
  %1611 = vmatmul.mubr.f32.gmra.mrb[0].mxu0 %v1531
  %v1612 = vpop.f32.mrb[0].mxu0
  %v1613 = vadd.f32 0.0, %v1612
  %v1614 = vpop.f32.mrb[0].mxu0
  %1615 = vmatprep.mubr.f32.mxu0 0.0
  %1616 = vmatmul.mubr.f32.gmra.mrb[0].mxu0 %v1534
  %v1617 = vpop.f32.mrb[0].mxu0
  %v1618 = vadd.f32 0.0, %v1617
  %v1619 = vpop.f32.mrb[0].mxu0
  %1620 = vmatprep.mubr.f32.mxu0 0.0
  %1621 = vmatmul.mubr.f32.gmra.mrb[0].mxu0 %v1537
  %v1622 = vpop.f32.mrb[0].mxu0
  %v1623 = vadd.f32 0.0, %v1622
  %v1624 = vpop.f32.mrb[0].mxu0
  %1625 = vmatprep.mubr.f32.mxu0 0.0
  %1626 = vmatmul.mubr.f32.gmra.mrb[0].mxu0 %v1540
  %v1627 = vpop.f32.mrb[0].mxu0
  %v1628 = vadd.f32 0.0, %v1627
  %v1629 = vpop.f32.mrb[0].mxu0
  %1630 = vdwg.mxu0
  %v1632 = vsel %vm1405, %v1431, 0
  %1634 = vmatprep.subr.mxu0 0.0
  %1635 = vmatpush1.xpose.msra.mxu0 %v1531
  %1636 = vmatprep.subr.mxu0 0.0
  %1637 = vmatpush1.xpose.msra.mxu0 %v1534
  %1638 = vmatprep.subr.mxu0 0.0
  %1639 = vmatpush1.xpose.msra.mxu0 %v1537
  %1640 = vmatprep.subr.mxu0 0.0
  %1641 = vmatpush1.xpose.msra.mxu0 %v1540
  %1642 = vmatprep.subr.mxu0 0.0
  %1643 = vmatpush1.xpose.msra.mxu0 0.0
  %1644 = vmatprep.subr.mxu0 0.0
  %1645 = vmatpush1.xpose.msra.mxu0 0.0
  %1646 = vmatprep.subr.mxu0 0.0
  %1647 = vmatpush1.xpose.msra.mxu0 0.0
  %1648 = vmatprep.subr.mxu0 0.0
  %1649 = vmatpush1.xpose.msra.mxu0 0.0
  %1650 = vmatprep.subr.mxu0 0.0
  %1651 = vmatpush1.xpose.msra.mxu0 0.0
  %1652 = vmatprep.subr.mxu0 0.0
  %1653 = vmatpush1.xpose.msra.mxu0 0.0
  %1654 = vmatprep.subr.mxu0 0.0
  %1655 = vmatpush1.xpose.msra.mxu0 0.0
  %1656 = vmatprep.subr.mxu0 0.0
  %1657 = vmatpush1.xpose.msra.mxu0 0.0
  %1658 = vmatprep.subr.mxu0 0.0
  %1659 = vmatpush1.xpose.msra.mxu0 0.0
  %1660 = vmatprep.subr.mxu0 0.0
  %1661 = vmatpush1.xpose.msra.mxu0 0.0
  %1662 = vmatprep.subr.mxu0 0.0
  %1663 = vmatpush1.xpose.msra.mxu0 0.0
  %1664 = vmatprep.subr.mxu0 0.0
  %1665 = vmatpush1.xpose.msra.mxu0 0.0
  %1666 = vmatprep.subr.mxu0 0.0
  %1667 = vmatpush1.xpose.msra.mxu0 0.0
  %1668 = vmatprep.subr.mxu0 0.0
  %1669 = vmatpush1.xpose.msra.mxu0 0.0
  %1670 = vmatprep.subr.mxu0 0.0
  %1671 = vmatpush1.xpose.msra.mxu0 0.0
  %1672 = vmatprep.subr.mxu0 0.0
  %1673 = vmatpush1.xpose.msra.mxu0 0.0
  %1674 = vmatprep.subr.mxu0 0.0
  %1675 = vmatpush1.xpose.msra.mxu0 0.0
  %1676 = vmatprep.subr.mxu0 0.0
  %1677 = vmatpush1.xpose.msra.mxu0 0.0
  %1678 = vmatprep.subr.mxu0 0.0
  %1679 = vmatpush1.xpose.msra.mxu0 0.0
  %1680 = vmatprep.subr.mxu0 0.0
  %1681 = vmatpush1.xpose.msra.mxu0 0.0
  %1682 = vmatprep.subr.mxu0 0.0
  %1683 = vmatpush1.xpose.msra.mxu0 0.0
  %1684 = vmatprep.subr.mxu0 0.0
  %1685 = vmatpush1.xpose.msra.mxu0 0.0
  %1686 = vmatprep.subr.mxu0 0.0
  %1687 = vmatpush1.xpose.msra.mxu0 0.0
  %1688 = vmatprep.subr.mxu0 0.0
  %1689 = vmatpush1.xpose.msra.mxu0 0.0
  %1690 = vmatprep.subr.mxu0 0.0
  %1691 = vmatpush1.xpose.msra.mxu0 0.0
  %1692 = vmatprep.subr.mxu0 0.0
  %1693 = vmatpush1.xpose.msra.mxu0 0.0
  %1694 = vmatprep.subr.mxu0 0.0
  %1695 = vmatpush1.xpose.msra.mxu0 0.0
  %1696 = vmatprep.subr.mxu0 0.0
  %1697 = vmatpush1.xpose.msra.mxu0 0.0
  %1698 = vmatprep.mubr.f32.mxu0 0.0
  %1699 = vmatmul.mubr.f32.gmra.mrb[0].mxu0 %v1632
  %v1700 = vpop.f32.mrb[0].mxu0
  %v1701 = vadd.f32 0.0, %v1700
  %v1702 = vpop.f32.mrb[0].mxu0
  %1703 = vdwg.mxu0
  %1705 = vset.pattern.permute.xlu0 0
  %1706 = vperm.xlu0 %1705, %v1613
  %v1707 = vpop.permute.xlu0 %1706
  %1710 = vset.pattern.permute.xlu0 0
  %1711 = vperm.xlu0 %1710, %v1618
  %v1712 = vpop.permute.xlu0 %1711
  %1715 = vset.pattern.permute.xlu0 0
  %1716 = vperm.xlu0 %1715, %v1623
  %v1717 = vpop.permute.xlu0 %1716
  %1720 = vset.pattern.permute.xlu0 0
  %1721 = vperm.xlu0 %1720, %v1628
  %v1722 = vpop.permute.xlu0 %1721
  %v1724 = vlaneseq
  %v1725 = vshrl.u32 %v1724, 7
  %v1726 = vsub.s32 0, %v1725
  %v1727 = vrot.slane %v1701, %v1726
  %v1728 = vadd.f32 %v1707, %v1727
  %v1729 = vadd.f32 %v1712, %v1727
  %v1730 = vadd.f32 %v1717, %v1727
  %v1731 = vadd.f32 %v1722, %v1727
  %vm1732 = vcmp.ge.f32.partialorder %v1728, 0.0
  %vm1733 = vcmp.ge.f32.partialorder %v1729, 0.0
  %vm1734 = vcmp.ge.f32.partialorder %v1730, 0.0
  %vm1735 = vcmp.ge.f32.partialorder %v1731, 0.0
  %v1736 = vmul.f32 %v1728, 0.2
  %v1737 = vmul.f32 %v1729, 0.2
  %v1738 = vmul.f32 %v1730, 0.2
  %v1739 = vmul.f32 %v1731, 0.2
  %v1740 = vsel %vm1732, %v1728, %v1736
  %v1741 = vsel %vm1733, %v1729, %v1737
  %v1742 = vsel %vm1734, %v1730, %v1738
  %v1743 = vsel %vm1735, %v1731, %v1739
  %v1744 = vsel %vm23, %v1740, -1e+30
  %v1745 = vsel %vm24, %v1741, -1e+30
  %v1746 = vsel %vm25, %v1742, -1e+30
  %v1747 = vsel %vm26, %v1743, -1e+30
  %v1748 = vsel %vm348, %v1744, -inf
  %1749 = vmax.xlane.f32.xlu0 %v1748
  %v1750 = vpop.xlane.xlu0 %1749
  %v1751 = vsel %vm348, %v1745, -inf
  %1752 = vmax.xlane.f32.xlu0 %v1751
  %v1753 = vpop.xlane.xlu0 %1752
  %v1754 = vsel %vm348, %v1746, -inf
  %1755 = vmax.xlane.f32.xlu0 %v1754
  %v1756 = vpop.xlane.xlu0 %1755
  %v1757 = vsel %vm348, %v1747, -inf
  %1758 = vmax.xlane.f32.xlu0 %v1757
  %v1759 = vpop.xlane.xlu0 %1758
  %v1760 = vsub.f32 %v1744, %v1750
  %v1761 = vsub.f32 %v1745, %v1753
  %v1762 = vsub.f32 %v1746, %v1756
  %v1763 = vsub.f32 %v1747, %v1759
  %v1764 = vmul.f32 %v1760, 1.442695
  %v1765 = vpow.pop %v1764
  %v1766 = vmul.f32 %v1761, 1.442695
  %v1767 = vpow.pop %v1766
  %v1768 = vmul.f32 %v1762, 1.442695
  %v1769 = vpow.pop %v1768
  %v1770 = vmul.f32 %v1763, 1.442695
  %v1771 = vpow.pop %v1770
  %v1772 = vsel %vm348, %v1765, 0.0
  %1773 = vadd.xlane.f32.xlu0 %v1772
  %v1774 = vpop.xlane.xlu0 %1773
  %v1775 = vsel %vm348, %v1767, 0.0
  %1776 = vadd.xlane.f32.xlu0 %v1775
  %v1777 = vpop.xlane.xlu0 %1776
  %v1778 = vsel %vm348, %v1769, 0.0
  %1779 = vadd.xlane.f32.xlu0 %v1778
  %v1780 = vpop.xlane.xlu0 %1779
  %v1781 = vsel %vm348, %v1771, 0.0
  %1782 = vadd.xlane.f32.xlu0 %v1781
  %v1783 = vpop.xlane.xlu0 %1782
  %v1784 = vmax.f32 %v1774, 1e-30
  %v1785 = vmax.f32 %v1777, 1e-30
  %v1786 = vmax.f32 %v1780, 1e-30
  %v1787 = vmax.f32 %v1783, 1e-30
  %v1788 = vrcp.pop %v1784
  %v1789 = vrcp.pop %v1785
  %v1790 = vrcp.pop %v1786
  %v1791 = vrcp.pop %v1787
  %v1792 = vmul.f32 %v1765, %v1788
  %v1793 = vmul.f32 %v1767, %v1789
  %v1794 = vmul.f32 %v1769, %v1790
  %v1795 = vmul.f32 %v1771, %v1791
  %v1797 = vsel %vm348, %v1792, 0
  %v1800 = vsel %vm348, %v1793, 0
  %v1803 = vsel %vm348, %v1794, 0
  %v1806 = vsel %vm348, %v1795, 0
  %1808 = vmatprep.subr.mxu0 0.0
  %1809 = vmatpush1.msra.mxu0 %v1512
  %1810 = vmatprep.subr.mxu0 0.0
  %1811 = vmatpush1.msra.mxu0 %v1517
  %1812 = vmatprep.subr.mxu0 0.0
  %1813 = vmatpush1.msra.mxu0 %v1522
  %1814 = vmatprep.subr.mxu0 0.0
  %1815 = vmatpush1.msra.mxu0 %v1527
  %1816 = vmatprep.subr.mxu0 0.0
  %1817 = vmatpush1.msra.mxu0 0.0
  %1818 = vmatprep.subr.mxu0 0.0
  %1819 = vmatpush1.msra.mxu0 0.0
  %1820 = vmatprep.subr.mxu0 0.0
  %1821 = vmatpush1.msra.mxu0 0.0
  %1822 = vmatprep.subr.mxu0 0.0
  %1823 = vmatpush1.msra.mxu0 0.0
  %1824 = vmatprep.subr.mxu0 0.0
  %1825 = vmatpush1.msra.mxu0 0.0
  %1826 = vmatprep.subr.mxu0 0.0
  %1827 = vmatpush1.msra.mxu0 0.0
  %1828 = vmatprep.subr.mxu0 0.0
  %1829 = vmatpush1.msra.mxu0 0.0
  %1830 = vmatprep.subr.mxu0 0.0
  %1831 = vmatpush1.msra.mxu0 0.0
  %1832 = vmatprep.subr.mxu0 0.0
  %1833 = vmatpush1.msra.mxu0 0.0
  %1834 = vmatprep.subr.mxu0 0.0
  %1835 = vmatpush1.msra.mxu0 0.0
  %1836 = vmatprep.subr.mxu0 0.0
  %1837 = vmatpush1.msra.mxu0 0.0
  %1838 = vmatprep.subr.mxu0 0.0
  %1839 = vmatpush1.msra.mxu0 0.0
  %1840 = vmatprep.subr.mxu0 0.0
  %1841 = vmatpush1.msra.mxu0 0.0
  %1842 = vmatprep.subr.mxu0 0.0
  %1843 = vmatpush1.msra.mxu0 0.0
  %1844 = vmatprep.subr.mxu0 0.0
  %1845 = vmatpush1.msra.mxu0 0.0
  %1846 = vmatprep.subr.mxu0 0.0
  %1847 = vmatpush1.msra.mxu0 0.0
  %1848 = vmatprep.subr.mxu0 0.0
  %1849 = vmatpush1.msra.mxu0 0.0
  %1850 = vmatprep.subr.mxu0 0.0
  %1851 = vmatpush1.msra.mxu0 0.0
  %1852 = vmatprep.subr.mxu0 0.0
  %1853 = vmatpush1.msra.mxu0 0.0
  %1854 = vmatprep.subr.mxu0 0.0
  %1855 = vmatpush1.msra.mxu0 0.0
  %1856 = vmatprep.subr.mxu0 0.0
  %1857 = vmatpush1.msra.mxu0 0.0
  %1858 = vmatprep.subr.mxu0 0.0
  %1859 = vmatpush1.msra.mxu0 0.0
  %1860 = vmatprep.subr.mxu0 0.0
  %1861 = vmatpush1.msra.mxu0 0.0
  %1862 = vmatprep.subr.mxu0 0.0
  %1863 = vmatpush1.msra.mxu0 0.0
  %1864 = vmatprep.subr.mxu0 0.0
  %1865 = vmatpush1.msra.mxu0 0.0
  %1866 = vmatprep.subr.mxu0 0.0
  %1867 = vmatpush1.msra.mxu0 0.0
  %1868 = vmatprep.subr.mxu0 0.0
  %1869 = vmatpush1.msra.mxu0 0.0
  %1870 = vmatprep.subr.mxu0 0.0
  %1871 = vmatpush1.msra.mxu0 0.0
  %1872 = vmatprep.mubr.f32.mxu0 0.0
  %1873 = vmatmul.mubr.f32.gmra.mrb[0].mxu0 %v1797
  %v1874 = vpop.f32.mrb[0].mxu0
  %v1875 = vadd.f32 0.0, %v1874
  %v1876 = vpop.f32.mrb[0].mxu0
  %1877 = vmatprep.mubr.f32.mxu0 0.0
  %1878 = vmatmul.mubr.f32.gmra.mrb[0].mxu0 %v1800
  %v1879 = vpop.f32.mrb[0].mxu0
  %v1880 = vadd.f32 0.0, %v1879
  %v1881 = vpop.f32.mrb[0].mxu0
  %1882 = vmatprep.mubr.f32.mxu0 0.0
  %1883 = vmatmul.mubr.f32.gmra.mrb[0].mxu0 %v1803
  %v1884 = vpop.f32.mrb[0].mxu0
  %v1885 = vadd.f32 0.0, %v1884
  %v1886 = vpop.f32.mrb[0].mxu0
  %1887 = vmatprep.mubr.f32.mxu0 0.0
  %1888 = vmatmul.mubr.f32.gmra.mrb[0].mxu0 %v1806
  %v1889 = vpop.f32.mrb[0].mxu0
  %v1890 = vadd.f32 0.0, %v1889
  %v1891 = vpop.f32.mrb[0].mxu0
  %1892 = vdwg.mxu0
  %1893 = vrot.lane.b32.xlu0 %v116, 4
  %v1894 = vpop.permute.xlu0 %1893
  %1895 = vrot.lane.b32.xlu0 %v121, 4
  %v1896 = vpop.permute.xlu0 %1895
  %1897 = vrot.lane.b32.xlu0 %v126, 4
  %v1898 = vpop.permute.xlu0 %1897
  %1899 = vrot.lane.b32.xlu0 %v131, 4
  %v1900 = vpop.permute.xlu0 %1899
  %1905 = vrot.lane.b32.xlu0 %v815, 20
  %v1906 = vpop.permute.xlu0 %1905
  %1907 = vrot.lane.b32.xlu0 %v820, 20
  %v1908 = vpop.permute.xlu0 %1907
  %1909 = vrot.lane.b32.xlu0 %v825, 20
  %v1910 = vpop.permute.xlu0 %1909
  %1911 = vrot.lane.b32.xlu0 %v830, 20
  %v1912 = vpop.permute.xlu0 %1911
  %1917 = vrot.lane.b32.xlu0 %v1512, 28
  %v1918 = vpop.permute.xlu0 %1917
  %1919 = vrot.lane.b32.xlu0 %v1517, 28
  %v1920 = vpop.permute.xlu0 %1919
  %1921 = vrot.lane.b32.xlu0 %v1522, 28
  %v1922 = vpop.permute.xlu0 %1921
  %1923 = vrot.lane.b32.xlu0 %v1527, 28
  %v1924 = vpop.permute.xlu0 %1923
  %1929 = vrot.lane.b32.xlu0 %v1792, 32
  %v1930 = vpop.permute.xlu0 %1929
  %1931 = vrot.lane.b32.xlu0 %v1793, 32
  %v1932 = vpop.permute.xlu0 %1931
  %1933 = vrot.lane.b32.xlu0 %v1794, 32
  %v1934 = vpop.permute.xlu0 %1933
  %1935 = vrot.lane.b32.xlu0 %v1795, 32
  %v1936 = vpop.permute.xlu0 %1935
  %v1941 = vsel %vm1405, %v1875, %v1894
  %v1942 = vsel %vm1405, %v1880, %v1896
  %v1943 = vsel %vm1405, %v1885, %v1898
  %v1944 = vsel %vm1405, %v1890, %v1900
  %vm1945 = vcmask 162816
  %v1946 = vsel %vm1945, %v1941, %v1906
  %v1947 = vsel %vm1945, %v1942, %v1908
  %v1948 = vsel %vm1945, %v1943, %v1910
  %v1949 = vsel %vm1945, %v1944, %v1912
  %vm1950 = vcmask 228352
  %v1951 = vsel %vm1950, %v1946, %v1918
  %v1952 = vsel %vm1950, %v1947, %v1920
  %v1953 = vsel %vm1950, %v1948, %v1922
  %v1954 = vsel %vm1950, %v1949, %v1924
  %v1955 = vsel %vm348, %v1951, %v1930
  %v1956 = vsel %vm348, %v1952, %v1932
  %v1957 = vsel %vm348, %v1953, %v1934
  %v1958 = vsel %vm348, %v1954, %v1936
  %vm1959 = vcmask 523264
  %v1960 = vsel %vm1959, %v1955, 0.0
  %v1961 = vsel %vm1959, %v1956, 0.0
  %v1962 = vsel %vm1959, %v1957, 0.0
  %v1963 = vsel %vm1959, %v1958, 0.0
  %1964 = vst [vmem:[%s3] sm:$0xff] %v1960
  %1965 = vst [vmem:[%s3 + $0x8] sm:$0xff] %v1961
  %1966 = vst [vmem:[%s3 + $0x10] sm:$0xff] %v1962
  %1967 = vst [vmem:[%s3 + $0x18] sm:$0xff] %v1963
  // Predicated region
  $region14: #{deepgat_forward.1} parent=0 // pred_check
    _
  $region15: #{deepgat_forward.1} parent=0 // pred_check_branch
    %1969 = sbr.rel (0) target = $region17
  $region16: #{deepgat_forward.1} parent=0 // pred_region
    _
  $region17: #{deepgat_forward.1} parent=0 // pred_fallthru
    _
  // Predicated region
  $region18: #{deepgat_forward.1} parent=0 // pred_check
    _
  $region19: #{deepgat_forward.1} parent=0 // pred_check_branch
    %1971 = sbr.rel (0) target = $region21
  $region20: #{deepgat_forward.1} parent=0 // pred_region
    _
  $region21: #{deepgat_forward.1} parent=0 // pred_fallthru
    _

</llo_original>
